<compile_context>
chip_gen: v5e
topology: v5e:2x2
jax: 0.10.0
libtpu: 0.0.40
codegen_flags: <defaults>
</compile_context>

<pallas_src>
import functools
import math

import jax
import jax.numpy as jnp
from jax.experimental import pallas as pl
from jax.experimental.pallas import tpu as pltpu

# ---- scaled-down configuration (original: C=768, spatial 18 x 24) -----------
C = 128            # channel / hidden width          (original 768)
C8 = C // 8        # query/key projection width      (original 96)
KH, KW = 16, 16    # ConvTranspose kernel == stride == output spatial (orig 18x24)
WH = KH * KW       # number of spatial positions     (original 432)
TQ = 128           # query-position tile per grid step; must divide WH
BN_EPS = 1e-5      # torch.nn.BatchNorm2d default

assert WH % TQ == 0


# ============================ fused Pallas kernel ============================

def _blend_kernel(up_ref, x2_ref, wq_ref, bq_ref, wk_ref, bk_ref,
                  wv_ref, bv_ref, o_ref, *, inv_scale):
    """One grid step = TQ query positions; K/V built from the full x2 tile.

    Layouts (all VMEM-resident for the whole step):
      up_ref : (TQ, C)  bf16   upsampled x1, rows = query positions
      x2_ref : (C, WH)  bf16   x2 in its native CHW layout (channels x spatial)
      wq_ref : (C, C8)  bf16   folded (1x1 conv + BN) query weight, transposed
      wk_ref : (C8, C)  bf16   folded key weight
      wv_ref : (C, C)   bf16   folded value weight
      b*_ref : f32 per-channel biases, broadcast along the other axis
      o_ref  : (C, TQ)  f32    output block in CHW layout
    """
    up = up_ref[...]
    x2 = x2_ref[...]

    # 1x1 conv + folded BatchNorm projections (bf16 MXU, f32 accumulate).
    q = jnp.dot(up, wq_ref[...], preferred_element_type=jnp.float32) + bq_ref[...]    # (TQ, C8)
    kt = jnp.dot(wk_ref[...], x2, preferred_element_type=jnp.float32) + bk_ref[...]   # (C8, WH)
    vt = jnp.dot(wv_ref[...], x2, preferred_element_type=jnp.float32) + bv_ref[...]   # (C,  WH)

    # energy = Q K^T / sqrt(C//8); softmax over key positions (f32 throughout).
    energy = jnp.dot(q, kt, preferred_element_type=jnp.float32) * inv_scale           # (TQ, WH)
    m = jnp.max(energy, axis=-1, keepdims=True)
    p = jnp.exp(energy - m)
    attn = p * pl.reciprocal(jnp.sum(p, axis=-1, keepdims=True), approx=True)         # (TQ, WH)

    # out[c, i] = sum_j V[c, j] * attn[i, j]   (== torch.bmm(V, attn.permute(0,2,1)))
    out = jax.lax.dot_general(
        vt.astype(jnp.bfloat16), attn.astype(jnp.bfloat16),
        (((1,), (1,)), ((), ())), preferred_element_type=jnp.float32)                 # (C, TQ)
    o_ref[...] = out


# ================================ wrapper ====================================

def _fold_conv1x1_bn(w, b, bn):
    """Fold eval-mode BatchNorm2d into a 1x1 conv: y[o] = sum_c W'[o,c] x[c] + b'[o]."""
    s = bn["gamma"] * jax.lax.rsqrt(bn["rv"] + BN_EPS)
    return w * s[:, None], s * (b - bn["rm"]) + bn["beta"]


def feature_blending_forward(x1, x2, params):
    """FeatureBlendingNetwork.forward with use_cross=1 (the default path).

    x1: (1, C) feature vector, x2: (1, C, KH, KW).  Returns (1, C, KH, KW).
    """
    assert x1.shape == (1, C) and x2.shape == (1, C, KH, KW)

    # ---- MiniUpsamplingNetwork ---------------------------------------------
    # ConvTranspose2d(1, 1, kernel=stride=(KH, KW)) applied to x1.view(1,1,1,C),
    # followed by .view(1, C, KH, KW).  The conv is an outer product; the .view
    # is a channel/spatial scramble of that outer product.
    # TODO(synk): the C*KH*KW-element .view scramble has no block structure, so it
    # stays as three tiny XLA ops in the wrapper instead of going in the kernel.
    ct = params["up_w"].reshape(KH, 1, KW) * x1.reshape(1, C, 1) + params["up_b"]
    up_chw = ct.reshape(C, WH)               # exactly torch's .view(1, C, KH, KW)
    up_rows = up_chw.T                       # (WH, C): rows = query positions

    x2_chw = x2.reshape(C, WH)               # batch-1 NCHW -> (C, WH), no transpose

    # ---- CrossAttentionLayer: fold conv bias + eval-BN into (W', b') --------
    wq, bq = _fold_conv1x1_bn(params["q_w"], params["q_b"], params["bn_q"])
    wk, bk = _fold_conv1x1_bn(params["k_w"], params["k_b"], params["bn_k"])
    wv, bv = _fold_conv1x1_bn(params["v_w"], params["v_b"], params["bn_v"])

    out = pl.pallas_call(
        functools.partial(_blend_kernel, inv_scale=1.0 / math.sqrt(C8)),
        out_shape=jax.ShapeDtypeStruct((C, WH), jnp.float32),
        grid=(WH // TQ,),
        in_specs=[
            pl.BlockSpec((TQ, C), lambda i: (i, 0)),     # up_rows: tiled over queries
            pl.BlockSpec((C, WH), lambda i: (0, 0)),     # x2: full, fetched once
            pl.BlockSpec((C, C8), lambda i: (0, 0)),     # Wq^T (folded)
            pl.BlockSpec((1, C8), lambda i: (0, 0)),     # bq
            pl.BlockSpec((C8, C), lambda i: (0, 0)),     # Wk (folded)
            pl.BlockSpec((C8, 1), lambda i: (0, 0)),     # bk
            pl.BlockSpec((C, C), lambda i: (0, 0)),      # Wv (folded)
            pl.BlockSpec((C, 1), lambda i: (0, 0)),      # bv
        ],
        out_specs=pl.BlockSpec((C, TQ), lambda i: (0, i)),
        compiler_params=pltpu.CompilerParams(dimension_semantics=("parallel",)),
    )(
        up_rows.astype(jnp.bfloat16),
        x2_chw.astype(jnp.bfloat16),
        wq.T.astype(jnp.bfloat16), bq.reshape(1, C8).astype(jnp.float32),
        wk.astype(jnp.bfloat16), bk.reshape(C8, 1).astype(jnp.float32),
        wv.astype(jnp.bfloat16), bv.reshape(C, 1).astype(jnp.float32),
    )

    # TODO(synk): the use_cross=0 branch (cat + conv1/bn1/relu + conv2/bn2/relu)
    # is dead code under the module's default config (use_cross=1 returns early)
    # and is therefore not implemented.
    return out.reshape(1, C, KH, KW)


# ============================== parameters ===================================

def make_params(key):
    def nrm(k, shape, std=0.05):
        return jax.random.normal(k, shape, jnp.float32) * std

    keys = jax.random.split(key, 11)

    def bn(k, c):
        k1, k2, k3, k4 = jax.random.split(k, 4)
        return {"gamma": 1.0 + nrm(k1, (c,)), "beta": nrm(k2, (c,)),
                "rm": nrm(k3, (c,)), "rv": 1.0 + jnp.abs(nrm(k4, (c,)))}

    return {
        # MiniUpsamplingNetwork: ConvTranspose2d(1, 1, kernel=stride=(KH, KW))
        "up_w": nrm(keys[0], (KH, KW)),
        "up_b": nrm(keys[1], ()),
        # CrossAttentionLayer(C): 1x1 convs (weights stored (out, in)) + BatchNorms
        "q_w": nrm(keys[2], (C8, C)), "q_b": nrm(keys[3], (C8,)), "bn_q": bn(keys[4], C8),
        "k_w": nrm(keys[5], (C8, C)), "k_b": nrm(keys[6], (C8,)), "bn_k": bn(keys[7], C8),
        "v_w": nrm(keys[8], (C, C)),  "v_b": nrm(keys[9], (C,)),  "bn_v": bn(keys[10], C),
    }


# ================================== main =====================================

if __name__ == "__main__":
    root = jax.random.PRNGKey(0)
    k_x1, k_x2, k_p = jax.random.split(root, 3)
    x1 = jax.random.normal(k_x1, (1, C), jnp.float32)            # scaled (1, 768) feature vector
    x2 = jax.random.normal(k_x2, (1, C, KH, KW), jnp.float32)    # scaled (1, 768, 18, 24) feature map
    params = make_params(k_p)

    fwd = jax.jit(feature_blending_forward)
    out = jax.block_until_ready(fwd(x1, x2, params))

    assert out.shape == (1, C, KH, KW), out.shape
    assert bool(jnp.all(jnp.isfinite(out)))
    print("KERNEL_OK")
</pallas_src>

<mosaic_0001>
module attributes {stable_mosaic.version = 11 : i64} {
  func.func @_blend_kernel(%arg0: i32, %arg1: memref<128x128xbf16, #tpu.memory_space<vmem>>, %arg2: memref<128x256xbf16, #tpu.memory_space<vmem>>, %arg3: memref<128x16xbf16, #tpu.memory_space<vmem>>, %arg4: memref<1x16xf32, #tpu.memory_space<vmem>>, %arg5: memref<16x128xbf16, #tpu.memory_space<vmem>>, %arg6: memref<16x1xf32, #tpu.memory_space<vmem>>, %arg7: memref<128x128xbf16, #tpu.memory_space<vmem>>, %arg8: memref<128x1xf32, #tpu.memory_space<vmem>>, %arg9: memref<128x128xf32, #tpu.memory_space<vmem>>) attributes {dimension_semantics = [#tpu.dimension_semantics<parallel>], iteration_bounds = array<i64: 2>, scalar_prefetch = 0 : i64, scratch_operands = 0 : i64, tpu.core_type = #tpu.core_type<tc>, window_params = [{transform_indices = @transform_0, window_bounds = array<i64: 128, 128>}, {pipeline_mode = #tpu.pipeline_mode<synchronous>, transform_indices = @transform_1, window_bounds = array<i64: 128, 256>}, {pipeline_mode = #tpu.pipeline_mode<synchronous>, transform_indices = @transform_2, window_bounds = array<i64: 128, 16>}, {pipeline_mode = #tpu.pipeline_mode<synchronous>, transform_indices = @transform_3, window_bounds = array<i64: 1, 16>}, {pipeline_mode = #tpu.pipeline_mode<synchronous>, transform_indices = @transform_4, window_bounds = array<i64: 16, 128>}, {pipeline_mode = #tpu.pipeline_mode<synchronous>, transform_indices = @transform_5, window_bounds = array<i64: 16, 1>}, {pipeline_mode = #tpu.pipeline_mode<synchronous>, transform_indices = @transform_6, window_bounds = array<i64: 128, 128>}, {pipeline_mode = #tpu.pipeline_mode<synchronous>, transform_indices = @transform_7, window_bounds = array<i64: 128, 1>}, {transform_indices = @transform_8, window_bounds = array<i64: 128, 128>}]} {
    %c0 = arith.constant 0 : index
    %c0_0 = arith.constant 0 : index
    %0 = vector.load %arg1[%c0, %c0_0] : memref<128x128xbf16, #tpu.memory_space<vmem>>, vector<128x128xbf16>
    %c0_1 = arith.constant 0 : index
    %c0_2 = arith.constant 0 : index
    %1 = vector.load %arg2[%c0_1, %c0_2] : memref<128x256xbf16, #tpu.memory_space<vmem>>, vector<128x256xbf16>
    %c0_3 = arith.constant 0 : index
    %c0_4 = arith.constant 0 : index
    %2 = vector.load %arg3[%c0_3, %c0_4] : memref<128x16xbf16, #tpu.memory_space<vmem>>, vector<128x16xbf16>
    %cst = arith.constant dense<0.000000e+00> : vector<128x16xf32>
    %3 = tpu.matmul %0, %2, %cst {dimension_numbers = #tpu.dot_dimension_numbers<[1], [0], [0], [1], [0, 0, 1, 1], [], []>} : vector<128x128xbf16>, vector<128x16xbf16>, vector<128x16xf32> -> vector<128x16xf32>
    %c0_5 = arith.constant 0 : index
    %c0_6 = arith.constant 0 : index
    %4 = vector.load %arg4[%c0_5, %c0_6] : memref<1x16xf32, #tpu.memory_space<vmem>>, vector<1x16xf32>
    %5 = vector.broadcast %4 : vector<1x16xf32> to vector<128x16xf32>
    %6 = arith.addf %3, %5 : vector<128x16xf32>
    %c0_7 = arith.constant 0 : index
    %c0_8 = arith.constant 0 : index
    %7 = vector.load %arg5[%c0_7, %c0_8] : memref<16x128xbf16, #tpu.memory_space<vmem>>, vector<16x128xbf16>
    %cst_9 = arith.constant dense<0.000000e+00> : vector<16x256xf32>
    %8 = tpu.matmul %7, %1, %cst_9 {dimension_numbers = #tpu.dot_dimension_numbers<[1], [0], [0], [1], [0, 0, 1, 1], [], []>} : vector<16x128xbf16>, vector<128x256xbf16>, vector<16x256xf32> -> vector<16x256xf32>
    %c0_10 = arith.constant 0 : index
    %c0_11 = arith.constant 0 : index
    %9 = vector.load %arg6[%c0_10, %c0_11] : memref<16x1xf32, #tpu.memory_space<vmem>>, vector<16x1xf32>
    %10 = vector.broadcast %9 : vector<16x1xf32> to vector<16x256xf32>
    %11 = arith.addf %8, %10 : vector<16x256xf32>
    %c0_12 = arith.constant 0 : index
    %c0_13 = arith.constant 0 : index
    %12 = vector.load %arg7[%c0_12, %c0_13] : memref<128x128xbf16, #tpu.memory_space<vmem>>, vector<128x128xbf16>
    %cst_14 = arith.constant dense<0.000000e+00> : vector<128x256xf32>
    %13 = tpu.matmul %12, %1, %cst_14 {dimension_numbers = #tpu.dot_dimension_numbers<[1], [0], [0], [1], [0, 0, 1, 1], [], []>} : vector<128x128xbf16>, vector<128x256xbf16>, vector<128x256xf32> -> vector<128x256xf32>
    %c0_15 = arith.constant 0 : index
    %c0_16 = arith.constant 0 : index
    %14 = vector.load %arg8[%c0_15, %c0_16] : memref<128x1xf32, #tpu.memory_space<vmem>>, vector<128x1xf32>
    %15 = vector.broadcast %14 : vector<128x1xf32> to vector<128x256xf32>
    %16 = arith.addf %13, %15 : vector<128x256xf32>
    %cst_17 = arith.constant dense<0.000000e+00> : vector<128x256xf32>
    %17 = tpu.matmul %6, %11, %cst_17 {dimension_numbers = #tpu.dot_dimension_numbers<[1], [0], [0], [1], [0, 0, 1, 1], [], []>} : vector<128x16xf32>, vector<16x256xf32>, vector<128x256xf32> -> vector<128x256xf32>
    %cst_18 = arith.constant 2.500000e-01 : f32
    %18 = vector.broadcast %cst_18 : f32 to vector<128x256xf32>
    %19 = arith.mulf %17, %18 : vector<128x256xf32>
    %cst_19 = arith.constant dense<0xFF800000> : vector<128xf32>
    %20 = vector.multi_reduction <maximumf>, %19, %cst_19 [1] : vector<128x256xf32> to vector<128xf32>
    %21 = vector.shape_cast %20 : vector<128xf32> to vector<128x1xf32>
    %22 = vector.broadcast %21 : vector<128x1xf32> to vector<128x256xf32>
    %23 = arith.subf %19, %22 : vector<128x256xf32>
    %24 = math.exp %23 : vector<128x256xf32>
    %cst_20 = arith.constant dense<0.000000e+00> : vector<128xf32>
    %25 = vector.multi_reduction <add>, %24, %cst_20 [1] : vector<128x256xf32> to vector<128xf32>
    %26 = vector.shape_cast %25 : vector<128xf32> to vector<128x1xf32>
    %27 = tpu.reciprocal %26 {approx = true} : vector<128x1xf32> -> vector<128x1xf32>
    %28 = vector.broadcast %27 : vector<128x1xf32> to vector<128x256xf32>
    %29 = arith.mulf %24, %28 : vector<128x256xf32>
    %30 = arith.truncf %16 : vector<128x256xf32> to vector<128x256xbf16>
    %31 = arith.truncf %29 : vector<128x256xf32> to vector<128x256xbf16>
    %cst_21 = arith.constant dense<0.000000e+00> : vector<128x128xf32>
    %32 = tpu.matmul %30, %31, %cst_21 {dimension_numbers = #tpu.dot_dimension_numbers<[1], [1], [0], [0], [0, 0, 1, 0], [], []>} : vector<128x256xbf16>, vector<128x256xbf16>, vector<128x128xf32> -> vector<128x128xf32>
    %c0_22 = arith.constant 0 : index
    %c0_23 = arith.constant 0 : index
    %33 = vector.load %arg9[%c0_22, %c0_23] : memref<128x128xf32, #tpu.memory_space<vmem>>, vector<128x128xf32>
    tpu.vector_store %arg9[%c0_22, %c0_23], %32 {strides = array<i32>} : memref<128x128xf32, #tpu.memory_space<vmem>>, vector<128x128xf32>,
    return
  }
  func.func @transform_0(%arg0: i32) -> (i32, i32) {
    %c0_i32 = arith.constant 0 : i32
    %c0_i32_0 = arith.constant 0 : i32
    return %arg0, %c0_i32 : i32, i32
  }
  func.func @transform_1(%arg0: i32) -> (i32, i32) {
    %c0_i32 = arith.constant 0 : i32
    %c0_i32_0 = arith.constant 0 : i32
    %c0_i32_1 = arith.constant 0 : i32
    return %c0_i32, %c0_i32_0 : i32, i32
  }
  func.func @transform_2(%arg0: i32) -> (i32, i32) {
    %c0_i32 = arith.constant 0 : i32
    %c0_i32_0 = arith.constant 0 : i32
    %c0_i32_1 = arith.constant 0 : i32
    return %c0_i32, %c0_i32_0 : i32, i32
  }
  func.func @transform_3(%arg0: i32) -> (i32, i32) {
    %c0_i32 = arith.constant 0 : i32
    %c0_i32_0 = arith.constant 0 : i32
    %c0_i32_1 = arith.constant 0 : i32
    return %c0_i32, %c0_i32_0 : i32, i32
  }
  func.func @transform_4(%arg0: i32) -> (i32, i32) {
    %c0_i32 = arith.constant 0 : i32
    %c0_i32_0 = arith.constant 0 : i32
    %c0_i32_1 = arith.constant 0 : i32
    return %c0_i32, %c0_i32_0 : i32, i32
  }
  func.func @transform_5(%arg0: i32) -> (i32, i32) {
    %c0_i32 = arith.constant 0 : i32
    %c0_i32_0 = arith.constant 0 : i32
    %c0_i32_1 = arith.constant 0 : i32
    return %c0_i32, %c0_i32_0 : i32, i32
  }
  func.func @transform_6(%arg0: i32) -> (i32, i32) {
    %c0_i32 = arith.constant 0 : i32
    %c0_i32_0 = arith.constant 0 : i32
    %c0_i32_1 = arith.constant 0 : i32
    return %c0_i32, %c0_i32_0 : i32, i32
  }
  func.func @transform_7(%arg0: i32) -> (i32, i32) {
    %c0_i32 = arith.constant 0 : i32
    %c0_i32_0 = arith.constant 0 : i32
    %c0_i32_1 = arith.constant 0 : i32
    return %c0_i32, %c0_i32_0 : i32, i32
  }
  func.func @transform_8(%arg0: i32) -> (i32, i32) {
    %c0_i32 = arith.constant 0 : i32
    %c0_i32_0 = arith.constant 0 : i32
    return %c0_i32, %arg0 : i32, i32
  }
}

</mosaic_0001>

<llo_original>
// kernel: feature_blending_forward.1
$region0: #{feature_blending_forward.1}
  #allocation0 [shape = 'u32[]', space=smem, size = 0x4, offset = 0x4, fixed_abs, tag = 'smem constant byte address 0x4 - core index']
  #allocation1 [shape = 'u32[72,128]{1,0:T(1,128)}', space=vmem, size = 0x9000, scoped, tag = 'internal scratch']
  %s0 = inlined_call_operand.vmem [shape: bf16[256,128], index: 0, kind: input, shape index: {}]
  %s1 = inlined_call_operand.vmem [shape: bf16[128,256], index: 1, kind: input, shape index: {}]
  %s2 = inlined_call_operand.vmem [shape: bf16[128,16], index: 2, kind: input, shape index: {}]
  %s3 = inlined_call_operand.vmem [shape: f32[1,16], index: 3, kind: input, shape index: {}]
  %s4 = inlined_call_operand.vmem [shape: bf16[16,128], index: 4, kind: input, shape index: {}]
  %s5 = inlined_call_operand.vmem [shape: f32[16,1], index: 5, kind: input, shape index: {}]
  %s6 = inlined_call_operand.vmem [shape: bf16[128,128], index: 6, kind: input, shape index: {}]
  %s7 = inlined_call_operand.vmem [shape: f32[128,1], index: 7, kind: input, shape index: {}]
  %s8 = inlined_call_operand.vmem [shape: f32[128,256], index: 8, kind: output, shape index: {}]
  %s9 = sld [smem:[#allocation0]]
  $region99: #{feature_blending_forward.1} parent=0
    _
  %s11 = ssub.s32 1, %s9
  %s12 = scalar_select 0, %s11, %s9
  $region1: #{feature_blending_forward.1} parent=0
    #allocation2 [shape = 'u8[131072]{0}', space=vmem, size = 0x20000, scoped, tag = 'output window, operand 0']
    loop: start=0, step=1, limit=4
    $region2: #{feature_blending_forward.1} parent=1 // loop_pre_header
      _
    $region3: #{feature_blending_forward.1} parent=1 // loop_header
      %s14 = sphi 0, %s18
      %p15 = scmp.ge.s32.totalorder %s14, 4
      %s24 = sphi 0, %s26
      %s27 = sphi 0, %s24
      %s28 = sphi 0, %s27
      %s44 = sphi 0, %s28
      %s48 = sphi 0, %s48
      %s50 = sphi 0, %s48
      %s51 = sphi 0, %s50
      %s65 = sphi 0, %s51
      %s69 = sphi 0, %s69
      %s71 = sphi 0, %s69
      %s72 = sphi 0, %s71
      %s86 = sphi 0, %s72
      %s90 = sphi 0, %s90
      %s92 = sphi 0, %s90
      %s93 = sphi 0, %s92
      %s107 = sphi 0, %s93
      %s111 = sphi 0, %s111
      %s113 = sphi 0, %s111
      %s114 = sphi 0, %s113
      %s128 = sphi 0, %s114
      %s132 = sphi 0, %s132
      %s134 = sphi 0, %s132
      %s135 = sphi 0, %s134
      %s149 = sphi 0, %s135
      %s153 = sphi 0, %s153
      %s155 = sphi 0, %s153
      %s156 = sphi 0, %s155
      %s170 = sphi 0, %s156
      %s174 = sphi 0, %s174
      %s176 = sphi 0, %s174
      %s177 = sphi 0, %s176
      %s191 = sphi 0, %s177
      %s197 = sphi 0, %s199
      %s200 = sphi 0, %s197
      %s201 = sphi 0, %s200
      %s217 = sphi 0, %s201
    $region4: #{feature_blending_forward.1} parent=1 // loop_header_branch
      %17 = sbr.rel (%p15) target = $region8
    $region5: #{feature_blending_forward.1} parent=1 // loop_body
      %s19 = ssub.s32 %s14, 1
      %s20 = ssub.s32 %s14, 2
      %s21 = sadd.s32 %s14, 1
      %s22 = ssub.s32 %s14, %s21
      %p23 = scmp.eq.s32.totalorder %s22, 0
      %s25 = sadd.s32 %s24, 1
      %s26 = scalar_select %p23, %s24, %s25
      %p29 = pneg %p23
      %p30 = scmp.eq.s32.totalorder %s14, 1
      %p31 = por %p29, %p30
      %p32 = scmp.ne.s32.totalorder %s24, %s27
      %p33 = scmp.eq.s32.totalorder %s14, 0
      %p34 = por %p32, %p33
      %p35 = scmp.ne.s32.totalorder %s24, %s27
      %p36 = scmp.eq.s32.totalorder %s19, 1
      %p37 = por %p35, %p36
      %p38 = scmp.ne.s32.totalorder %s27, %s28
      %p39 = scmp.eq.s32.totalorder %s19, 0
      %p40 = por %p38, %p39
      %p41 = scmp.ne.s32.totalorder %s27, %s28
      %p42 = scmp.eq.s32.totalorder %s20, 1
      %p43 = por %p41, %p42
      %p45 = scmp.ne.s32.totalorder %s28, %s44
      %p46 = scmp.eq.s32.totalorder %s20, 0
      %p47 = por %p45, %p46
      %s49 = sadd.s32 %s48, 1
      %p52 = scmp.eq.s32.totalorder %s14, 1
      %p53 = scmp.ne.s32.totalorder %s48, %s50
      %p54 = scmp.eq.s32.totalorder %s14, 0
      %p55 = por %p53, %p54
      %p56 = scmp.ne.s32.totalorder %s48, %s50
      %p57 = scmp.eq.s32.totalorder %s19, 1
      %p58 = por %p56, %p57
      %p59 = scmp.ne.s32.totalorder %s50, %s51
      %p60 = scmp.eq.s32.totalorder %s19, 0
      %p61 = por %p59, %p60
      %p62 = scmp.ne.s32.totalorder %s50, %s51
      %p63 = scmp.eq.s32.totalorder %s20, 1
      %p64 = por %p62, %p63
      %p66 = scmp.ne.s32.totalorder %s51, %s65
      %p67 = scmp.eq.s32.totalorder %s20, 0
      %p68 = por %p66, %p67
      %s70 = sadd.s32 %s69, 1
      %p73 = scmp.eq.s32.totalorder %s14, 1
      %p74 = scmp.ne.s32.totalorder %s69, %s71
      %p75 = scmp.eq.s32.totalorder %s14, 0
      %p76 = por %p74, %p75
      %p77 = scmp.ne.s32.totalorder %s69, %s71
      %p78 = scmp.eq.s32.totalorder %s19, 1
      %p79 = por %p77, %p78
      %p80 = scmp.ne.s32.totalorder %s71, %s72
      %p81 = scmp.eq.s32.totalorder %s19, 0
      %p82 = por %p80, %p81
      %p83 = scmp.ne.s32.totalorder %s71, %s72
      %p84 = scmp.eq.s32.totalorder %s20, 1
      %p85 = por %p83, %p84
      %p87 = scmp.ne.s32.totalorder %s72, %s86
      %p88 = scmp.eq.s32.totalorder %s20, 0
      %p89 = por %p87, %p88
      %s91 = sadd.s32 %s90, 1
      %p94 = scmp.eq.s32.totalorder %s14, 1
      %p95 = scmp.ne.s32.totalorder %s90, %s92
      %p96 = scmp.eq.s32.totalorder %s14, 0
      %p97 = por %p95, %p96
      %p98 = scmp.ne.s32.totalorder %s90, %s92
      %p99 = scmp.eq.s32.totalorder %s19, 1
      %p100 = por %p98, %p99
      %p101 = scmp.ne.s32.totalorder %s92, %s93
      %p102 = scmp.eq.s32.totalorder %s19, 0
      %p103 = por %p101, %p102
      %p104 = scmp.ne.s32.totalorder %s92, %s93
      %p105 = scmp.eq.s32.totalorder %s20, 1
      %p106 = por %p104, %p105
      %p108 = scmp.ne.s32.totalorder %s93, %s107
      %p109 = scmp.eq.s32.totalorder %s20, 0
      %p110 = por %p108, %p109
      %s112 = sadd.s32 %s111, 1
      %p115 = scmp.eq.s32.totalorder %s14, 1
      %p116 = scmp.ne.s32.totalorder %s111, %s113
      %p117 = scmp.eq.s32.totalorder %s14, 0
      %p118 = por %p116, %p117
      %p119 = scmp.ne.s32.totalorder %s111, %s113
      %p120 = scmp.eq.s32.totalorder %s19, 1
      %p121 = por %p119, %p120
      %p122 = scmp.ne.s32.totalorder %s113, %s114
      %p123 = scmp.eq.s32.totalorder %s19, 0
      %p124 = por %p122, %p123
      %p125 = scmp.ne.s32.totalorder %s113, %s114
      %p126 = scmp.eq.s32.totalorder %s20, 1
      %p127 = por %p125, %p126
      %p129 = scmp.ne.s32.totalorder %s114, %s128
      %p130 = scmp.eq.s32.totalorder %s20, 0
      %p131 = por %p129, %p130
      %s133 = sadd.s32 %s132, 1
      %p136 = scmp.eq.s32.totalorder %s14, 1
      %p137 = scmp.ne.s32.totalorder %s132, %s134
      %p138 = scmp.eq.s32.totalorder %s14, 0
      %p139 = por %p137, %p138
      %p140 = scmp.ne.s32.totalorder %s132, %s134
      %p141 = scmp.eq.s32.totalorder %s19, 1
      %p142 = por %p140, %p141
      %p143 = scmp.ne.s32.totalorder %s134, %s135
      %p144 = scmp.eq.s32.totalorder %s19, 0
      %p145 = por %p143, %p144
      %p146 = scmp.ne.s32.totalorder %s134, %s135
      %p147 = scmp.eq.s32.totalorder %s20, 1
      %p148 = por %p146, %p147
      %p150 = scmp.ne.s32.totalorder %s135, %s149
      %p151 = scmp.eq.s32.totalorder %s20, 0
      %p152 = por %p150, %p151
      %s154 = sadd.s32 %s153, 1
      %p157 = scmp.eq.s32.totalorder %s14, 1
      %p158 = scmp.ne.s32.totalorder %s153, %s155
      %p159 = scmp.eq.s32.totalorder %s14, 0
      %p160 = por %p158, %p159
      %p161 = scmp.ne.s32.totalorder %s153, %s155
      %p162 = scmp.eq.s32.totalorder %s19, 1
      %p163 = por %p161, %p162
      %p164 = scmp.ne.s32.totalorder %s155, %s156
      %p165 = scmp.eq.s32.totalorder %s19, 0
      %p166 = por %p164, %p165
      %p167 = scmp.ne.s32.totalorder %s155, %s156
      %p168 = scmp.eq.s32.totalorder %s20, 1
      %p169 = por %p167, %p168
      %p171 = scmp.ne.s32.totalorder %s156, %s170
      %p172 = scmp.eq.s32.totalorder %s20, 0
      %p173 = por %p171, %p172
      %s175 = sadd.s32 %s174, 1
      %p178 = scmp.eq.s32.totalorder %s14, 1
      %p179 = scmp.ne.s32.totalorder %s174, %s176
      %p180 = scmp.eq.s32.totalorder %s14, 0
      %p181 = por %p179, %p180
      %p182 = scmp.ne.s32.totalorder %s174, %s176
      %p183 = scmp.eq.s32.totalorder %s19, 1
      %p184 = por %p182, %p183
      %p185 = scmp.ne.s32.totalorder %s176, %s177
      %p186 = scmp.eq.s32.totalorder %s19, 0
      %p187 = por %p185, %p186
      %p188 = scmp.ne.s32.totalorder %s176, %s177
      %p189 = scmp.eq.s32.totalorder %s20, 1
      %p190 = por %p188, %p189
      %p192 = scmp.ne.s32.totalorder %s177, %s191
      %p193 = scmp.eq.s32.totalorder %s20, 0
      %p194 = por %p192, %p193
      %s195 = ssub.s32 %s14, %s21
      %p196 = scmp.eq.s32.totalorder %s195, 0
      %s198 = sadd.s32 %s197, 1
      %s199 = scalar_select %p196, %s197, %s198
      %p202 = pneg %p196
      %p203 = scmp.eq.s32.totalorder %s14, 1
      %p204 = por %p202, %p203
      %p205 = scmp.ne.s32.totalorder %s197, %s200
      %p206 = scmp.eq.s32.totalorder %s14, 0
      %p207 = por %p205, %p206
      %p208 = scmp.ne.s32.totalorder %s197, %s200
      %p209 = scmp.eq.s32.totalorder %s19, 1
      %p210 = por %p208, %p209
      %p211 = scmp.ne.s32.totalorder %s200, %s201
      %p212 = scmp.eq.s32.totalorder %s19, 0
      %p213 = por %p211, %p212
      %p214 = scmp.ne.s32.totalorder %s200, %s201
      %p215 = scmp.eq.s32.totalorder %s20, 1
      %p216 = por %p214, %p215
      %p218 = scmp.ne.s32.totalorder %s201, %s217
      %p219 = scmp.eq.s32.totalorder %s20, 0
      %p220 = por %p218, %p219
      %p221 = scmp.le.s32.totalorder 1, %s14
      %p222 = scmp.lt.s32.totalorder %s14, 3
      %p223 = pnand %p221, %p222
      %p224 = pneg %p223
      // Predicated region
      $region9: #{feature_blending_forward.1} parent=5 // pred_check
        _
      $region10: #{feature_blending_forward.1} parent=5 // pred_check_branch
        %226 = sbr.rel (%p223) target = $region12
      $region11: #{feature_blending_forward.1} parent=5 // pred_region
        %s227 = ssub.s32 %s14, 1
        // Predicated region
        $region13: #{feature_blending_forward.1} parent=11 // pred_check
          %p228 = pneg %p61
        $region14: #{feature_blending_forward.1} parent=11 // pred_check_branch
          %230 = sbr.rel (%p228) target = $region16
        $region15: #{feature_blending_forward.1} parent=11 // pred_region
          _
        $region16: #{feature_blending_forward.1} parent=11 // pred_fallthru
          _
        // Predicated region
        $region17: #{feature_blending_forward.1} parent=11 // pred_check
          %p231 = pneg %p82
        $region18: #{feature_blending_forward.1} parent=11 // pred_check_branch
          %233 = sbr.rel (%p231) target = $region20
        $region19: #{feature_blending_forward.1} parent=11 // pred_region
          _
        $region20: #{feature_blending_forward.1} parent=11 // pred_fallthru
          _
        // Predicated region
        $region21: #{feature_blending_forward.1} parent=11 // pred_check
          %p234 = pneg %p103
        $region22: #{feature_blending_forward.1} parent=11 // pred_check_branch
          %236 = sbr.rel (%p234) target = $region24
        $region23: #{feature_blending_forward.1} parent=11 // pred_region
          _
        $region24: #{feature_blending_forward.1} parent=11 // pred_fallthru
          _
        // Predicated region
        $region25: #{feature_blending_forward.1} parent=11 // pred_check
          %p237 = pneg %p124
        $region26: #{feature_blending_forward.1} parent=11 // pred_check_branch
          %239 = sbr.rel (%p237) target = $region28
        $region27: #{feature_blending_forward.1} parent=11 // pred_region
          _
        $region28: #{feature_blending_forward.1} parent=11 // pred_fallthru
          _
        // Predicated region
        $region29: #{feature_blending_forward.1} parent=11 // pred_check
          %p240 = pneg %p145
        $region30: #{feature_blending_forward.1} parent=11 // pred_check_branch
          %242 = sbr.rel (%p240) target = $region32
        $region31: #{feature_blending_forward.1} parent=11 // pred_region
          _
        $region32: #{feature_blending_forward.1} parent=11 // pred_fallthru
          _
        // Predicated region
        $region33: #{feature_blending_forward.1} parent=11 // pred_check
          %p243 = pneg %p166
        $region34: #{feature_blending_forward.1} parent=11 // pred_check_branch
          %245 = sbr.rel (%p243) target = $region36
        $region35: #{feature_blending_forward.1} parent=11 // pred_region
          _
        $region36: #{feature_blending_forward.1} parent=11 // pred_fallthru
          _
        // Predicated region
        $region37: #{feature_blending_forward.1} parent=11 // pred_check
          %p246 = pneg %p187
        $region38: #{feature_blending_forward.1} parent=11 // pred_check_branch
          %248 = sbr.rel (%p246) target = $region40
        $region39: #{feature_blending_forward.1} parent=11 // pred_region
          _
        $region40: #{feature_blending_forward.1} parent=11 // pred_fallthru
          _
      $region12: #{feature_blending_forward.1} parent=5 // pred_fallthru
        _
      %p249 = scmp.lt.s32.totalorder %s14, 2
      // Predicated region
      $region41: #{feature_blending_forward.1} parent=5 // pred_check
        %p250 = pneg %p249
      $region42: #{feature_blending_forward.1} parent=5 // pred_check_branch
        %252 = sbr.rel (%p250) target = $region44
      $region43: #{feature_blending_forward.1} parent=5 // pred_region
        // Predicated region
        $region45: #{feature_blending_forward.1} parent=43 // pred_check
          %p253 = pneg %p34
        $region46: #{feature_blending_forward.1} parent=43 // pred_check_branch
          %255 = sbr.rel (%p253) target = $region48
        $region47: #{feature_blending_forward.1} parent=43 // pred_region
          %s256 = smul.u32 16, %s14
          %p257 = scmp.lt.s32.totalorder %s256, 31
          %s258 = scalar_select %p257, %s256, 31
          %s259 = smul.addr %s258, 4
          %s260 = scalar_lea.vmem %s0, %s259
          %s261 = smul.u32 16, %s14
        $region48: #{feature_blending_forward.1} parent=43 // pred_fallthru
          _
      $region44: #{feature_blending_forward.1} parent=5 // pred_fallthru
        _
      %p262 = scmp.le.s32.totalorder 1, %s14
      %p263 = scmp.lt.s32.totalorder %s14, 3
      %p264 = pnand %p262, %p263
      %p265 = pneg %p264
      // Predicated region
      $region49: #{feature_blending_forward.1} parent=5 // pred_check
        _
      $region50: #{feature_blending_forward.1} parent=5 // pred_check_branch
        %267 = sbr.rel (%p264) target = $region52
      $region51: #{feature_blending_forward.1} parent=5 // pred_region
        %s268 = ssub.s32 %s14, 1
        %s269 = smul.u32 16, %s19
        %p270 = scmp.lt.s32.totalorder %s269, 31
        %s271 = scalar_select %p270, %s269, 31
        %s272 = smul.addr %s271, 4
        %s273 = scalar_lea.vmem %s0, %s272
        %p274 = pneg %p40
        %p275 = pneg %p37
        %p276 = pneg %p61
        %p277 = pneg %p58
        %p278 = pneg %p82
        %p279 = pneg %p79
        %p280 = pneg %p103
        %p281 = pneg %p100
        %p282 = pneg %p124
        %p283 = pneg %p121
        %p284 = pneg %p145
        %p285 = pneg %p142
        %p286 = pneg %p166
        %p287 = pneg %p163
        %p288 = pneg %p187
        %p289 = pneg %p184
        %p290 = pneg %p213
        %p291 = pneg %p210
        %s292 = sand.u32 %s200, 1
        %s293 = sand.u32 %s200, 1
        %s294 = smul.addr %s293, 128
        %s295 = scalar_lea.vmem [#allocation2], %s294
        %s296 = smul.u32 16, %s19
        %p297 = scmp.lt.s32.totalorder %s296, 31
        %s298 = scalar_select %p297, %s296, 31
        %s299 = smul.addr %s298, 4
        %s300 = scalar_lea.vmem %s0, %s299
        %s301 = smul.u32 16, %s19
        %v302 = vld [vmem:[%s300] sm:$0xf]
        %v303 = vld [vmem:[%s300 + $0x4] sm:$0xf]
        %v304 = vld [vmem:[%s300 + $0x8] sm:$0xf]
        %v305 = vld [vmem:[%s300 + $0xc] sm:$0xf]
        %v306 = vld [vmem:[%s300 + $0x10] sm:$0xf]
        %v307 = vld [vmem:[%s300 + $0x14] sm:$0xf]
        %v308 = vld [vmem:[%s300 + $0x18] sm:$0xf]
        %v309 = vld [vmem:[%s300 + $0x1c] sm:$0xf]
        %v310 = vld [vmem:[%s300 + $0x20] sm:$0xf]
        %v311 = vld [vmem:[%s300 + $0x24] sm:$0xf]
        %v312 = vld [vmem:[%s300 + $0x28] sm:$0xf]
        %v313 = vld [vmem:[%s300 + $0x2c] sm:$0xf]
        %v314 = vld [vmem:[%s300 + $0x30] sm:$0xf]
        %v315 = vld [vmem:[%s300 + $0x34] sm:$0xf]
        %v316 = vld [vmem:[%s300 + $0x38] sm:$0xf]
        %v317 = vld [vmem:[%s300 + $0x3c] sm:$0xf]
        %v318 = vld [vmem:[%s1] sm:$0xff]
        %v319 = vld [vmem:[%s1 + $0x8] sm:$0xff]
        %v320 = vld [vmem:[%s1 + $0x10] sm:$0xff]
        %v321 = vld [vmem:[%s1 + $0x18] sm:$0xff]
        %v322 = vld [vmem:[%s1 + $0x20] sm:$0xff]
        %v323 = vld [vmem:[%s1 + $0x28] sm:$0xff]
        %v324 = vld [vmem:[%s1 + $0x30] sm:$0xff]
        %v325 = vld [vmem:[%s1 + $0x38] sm:$0xff]
        %v326 = vld [vmem:[%s1 + $0x40] sm:$0xff]
        %v327 = vld [vmem:[%s1 + $0x48] sm:$0xff]
        %v328 = vld [vmem:[%s1 + $0x50] sm:$0xff]
        %v329 = vld [vmem:[%s1 + $0x58] sm:$0xff]
        %v330 = vld [vmem:[%s1 + $0x60] sm:$0xff]
        %v331 = vld [vmem:[%s1 + $0x68] sm:$0xff]
        %v332 = vld [vmem:[%s1 + $0x70] sm:$0xff]
        %v333 = vld [vmem:[%s1 + $0x78] sm:$0xff]
        %v334 = vld [vmem:[%s2] sm:$0xf]
        %v335 = vld [vmem:[%s2 + $0x4] sm:$0xf]
        %v336 = vld [vmem:[%s2 + $0x8] sm:$0xf]
        %v337 = vld [vmem:[%s2 + $0xc] sm:$0xf]
        %v338 = vld [vmem:[%s2 + $0x10] sm:$0xf]
        %v339 = vld [vmem:[%s2 + $0x14] sm:$0xf]
        %v340 = vld [vmem:[%s2 + $0x18] sm:$0xf]
        %v341 = vld [vmem:[%s2 + $0x1c] sm:$0xf]
        %v342 = vld [vmem:[%s2 + $0x20] sm:$0xf]
        %v343 = vld [vmem:[%s2 + $0x24] sm:$0xf]
        %v344 = vld [vmem:[%s2 + $0x28] sm:$0xf]
        %v345 = vld [vmem:[%s2 + $0x2c] sm:$0xf]
        %v346 = vld [vmem:[%s2 + $0x30] sm:$0xf]
        %v347 = vld [vmem:[%s2 + $0x34] sm:$0xf]
        %v348 = vld [vmem:[%s2 + $0x38] sm:$0xf]
        %v349 = vld [vmem:[%s2 + $0x3c] sm:$0xf]
        %v350 = vld [vmem:[%s3] sm:$0x1]
        %v352 = vperm.slane %v350, 0
        %v370 = vunpack.c.l.b16 %v302
        %v371 = vunpack.c.l.b16 %v303
        %v372 = vunpack.c.l.b16 %v304
        %v373 = vunpack.c.l.b16 %v305
        %v374 = vunpack.c.l.b16 %v306
        %v375 = vunpack.c.l.b16 %v307
        %v376 = vunpack.c.l.b16 %v308
        %v377 = vunpack.c.l.b16 %v309
        %v378 = vunpack.c.l.b16 %v310
        %v379 = vunpack.c.l.b16 %v311
        %v380 = vunpack.c.l.b16 %v312
        %v381 = vunpack.c.l.b16 %v313
        %v382 = vunpack.c.l.b16 %v314
        %v383 = vunpack.c.l.b16 %v315
        %v384 = vunpack.c.l.b16 %v316
        %v385 = vunpack.c.l.b16 %v317
        %v386 = vpack.c.b16 %v371, %v370
        %v387 = vpack.c.b16 %v373, %v372
        %v388 = vpack.c.b16 %v375, %v374
        %v389 = vpack.c.b16 %v377, %v376
        %v390 = vpack.c.b16 %v379, %v378
        %v391 = vpack.c.b16 %v381, %v380
        %v392 = vpack.c.b16 %v383, %v382
        %v393 = vpack.c.b16 %v385, %v384
        %v418 = vunpack.c.l.b16 %v334
        %v419 = vunpack.c.l.b16 %v335
        %v420 = vunpack.c.l.b16 %v336
        %v421 = vunpack.c.l.b16 %v337
        %v422 = vunpack.c.l.b16 %v338
        %v423 = vunpack.c.l.b16 %v339
        %v424 = vunpack.c.l.b16 %v340
        %v425 = vunpack.c.l.b16 %v341
        %v426 = vunpack.c.l.b16 %v342
        %v427 = vunpack.c.l.b16 %v343
        %v428 = vunpack.c.l.b16 %v344
        %v429 = vunpack.c.l.b16 %v345
        %v430 = vunpack.c.l.b16 %v346
        %v431 = vunpack.c.l.b16 %v347
        %v432 = vunpack.c.l.b16 %v348
        %v433 = vunpack.c.l.b16 %v349
        %v434 = vpack.c.b16 %v419, %v418
        %v435 = vpack.c.b16 %v421, %v420
        %v436 = vpack.c.b16 %v423, %v422
        %v437 = vpack.c.b16 %v425, %v424
        %v438 = vpack.c.b16 %v427, %v426
        %v439 = vpack.c.b16 %v429, %v428
        %v440 = vpack.c.b16 %v431, %v430
        %v441 = vpack.c.b16 %v433, %v432
        %450 = vmatpush.bf16.msra.mxu0 %v441
        %451 = vmatpush.bf16.msra.mxu0 %v440
        %452 = vmatpush.bf16.msra.mxu0 %v439
        %453 = vmatpush.bf16.msra.mxu0 %v438
        %454 = vmatpush.bf16.msra.mxu0 %v437
        %455 = vmatpush.bf16.msra.mxu0 %v436
        %456 = vmatpush.bf16.msra.mxu0 %v435
        %457 = vmatpush.bf16.msra.mxu0 %v434
        %458 = vmatmul.bf16.gmra.mxu0 %v386
        %v459 = vpop.f32.mrf.mxu0
        %v460 = vadd.f32 %v352, %v459
        %v461 = vpop.f32.mrf.mxu0
        %v462 = vadd.f32 %v352, %v461
        %463 = vmatmul.bf16.gmra.mxu0 %v387
        %v464 = vpop.f32.mrf.mxu0
        %v465 = vadd.f32 %v352, %v464
        %v466 = vpop.f32.mrf.mxu0
        %v467 = vadd.f32 %v352, %v466
        %468 = vmatmul.bf16.gmra.mxu0 %v388
        %v469 = vpop.f32.mrf.mxu0
        %v470 = vadd.f32 %v352, %v469
        %v471 = vpop.f32.mrf.mxu0
        %v472 = vadd.f32 %v352, %v471
        %473 = vmatmul.bf16.gmra.mxu0 %v389
        %v474 = vpop.f32.mrf.mxu0
        %v475 = vadd.f32 %v352, %v474
        %v476 = vpop.f32.mrf.mxu0
        %v477 = vadd.f32 %v352, %v476
        %478 = vmatmul.bf16.gmra.mxu0 %v390
        %v479 = vpop.f32.mrf.mxu0
        %v480 = vadd.f32 %v352, %v479
        %v481 = vpop.f32.mrf.mxu0
        %v482 = vadd.f32 %v352, %v481
        %483 = vmatmul.bf16.gmra.mxu0 %v391
        %v484 = vpop.f32.mrf.mxu0
        %v485 = vadd.f32 %v352, %v484
        %v486 = vpop.f32.mrf.mxu0
        %v487 = vadd.f32 %v352, %v486
        %488 = vmatmul.bf16.gmra.mxu0 %v392
        %v489 = vpop.f32.mrf.mxu0
        %v490 = vadd.f32 %v352, %v489
        %v491 = vpop.f32.mrf.mxu0
        %v492 = vadd.f32 %v352, %v491
        %493 = vmatmul.bf16.gmra.mxu0 %v393
        %v494 = vpop.f32.mrf.mxu0
        %v495 = vadd.f32 %v352, %v494
        %v496 = vpop.f32.mrf.mxu0
        %v497 = vadd.f32 %v352, %v496
        %498 = vdwg.mxu0
        %v499 = vld [vmem:[%s4] sm:$0xf]
        %v500 = vld [vmem:[%s4 + $0x4] sm:$0xf]
        %v501 = vld [vmem:[%s5] sm:$0xff]
        %v502 = vld [vmem:[%s5 + $0x8] sm:$0xff]
        %504 = vset.pattern.permute.xlu0 0
        %505 = vperm.xlu0 %504, %v501
        %v506 = vpop.permute.xlu0 %505
        %509 = vset.pattern.permute.xlu0 0
        %510 = vperm.xlu0 %509, %v502
        %v511 = vpop.permute.xlu0 %510
        %v515 = vunpack.c.l.b16 %v499
        %v516 = vunpack.c.l.b16 %v500
        %v517 = vpack.c.b16 %v516, %v515
        %v535 = vunpack.c.l.b16 %v318
        %v536 = vunpack.c.h.b16 %v318
        %v537 = vunpack.c.l.b16 %v319
        %v538 = vunpack.c.h.b16 %v319
        %v539 = vunpack.c.l.b16 %v320
        %v540 = vunpack.c.h.b16 %v320
        %v541 = vunpack.c.l.b16 %v321
        %v542 = vunpack.c.h.b16 %v321
        %v543 = vunpack.c.l.b16 %v322
        %v544 = vunpack.c.h.b16 %v322
        %v545 = vunpack.c.l.b16 %v323
        %v546 = vunpack.c.h.b16 %v323
        %v547 = vunpack.c.l.b16 %v324
        %v548 = vunpack.c.h.b16 %v324
        %v549 = vunpack.c.l.b16 %v325
        %v550 = vunpack.c.h.b16 %v325
        %v551 = vunpack.c.l.b16 %v326
        %v552 = vunpack.c.h.b16 %v326
        %v553 = vunpack.c.l.b16 %v327
        %v554 = vunpack.c.h.b16 %v327
        %v555 = vunpack.c.l.b16 %v328
        %v556 = vunpack.c.h.b16 %v328
        %v557 = vunpack.c.l.b16 %v329
        %v558 = vunpack.c.h.b16 %v329
        %v559 = vunpack.c.l.b16 %v330
        %v560 = vunpack.c.h.b16 %v330
        %v561 = vunpack.c.l.b16 %v331
        %v562 = vunpack.c.h.b16 %v331
        %v563 = vunpack.c.l.b16 %v332
        %v564 = vunpack.c.h.b16 %v332
        %v565 = vunpack.c.l.b16 %v333
        %v566 = vunpack.c.h.b16 %v333
        %v567 = vpack.c.b16 %v537, %v535
        %v568 = vpack.c.b16 %v538, %v536
        %v569 = vpack.c.b16 %v541, %v539
        %v570 = vpack.c.b16 %v542, %v540
        %v571 = vpack.c.b16 %v545, %v543
        %v572 = vpack.c.b16 %v546, %v544
        %v573 = vpack.c.b16 %v549, %v547
        %v574 = vpack.c.b16 %v550, %v548
        %v575 = vpack.c.b16 %v553, %v551
        %v576 = vpack.c.b16 %v554, %v552
        %v577 = vpack.c.b16 %v557, %v555
        %v578 = vpack.c.b16 %v558, %v556
        %v579 = vpack.c.b16 %v561, %v559
        %v580 = vpack.c.b16 %v562, %v560
        %v581 = vpack.c.b16 %v565, %v563
        %v582 = vpack.c.b16 %v566, %v564
        %599 = vmatpush.bf16.msra.mxu0 %v581
        %600 = vmatpush.bf16.msra.mxu0 %v579
        %601 = vmatpush.bf16.msra.mxu0 %v577
        %602 = vmatpush.bf16.msra.mxu0 %v575
        %603 = vmatpush.bf16.msra.mxu0 %v573
        %604 = vmatpush.bf16.msra.mxu0 %v571
        %605 = vmatpush.bf16.msra.mxu0 %v569
        %606 = vmatpush.bf16.msra.mxu0 %v567
        %607 = vmatmul.bf16.gmra.mxu0 %v517
        %v608 = vpop.f32.mrf.mxu0
        %v609 = vadd.f32 %v506, %v608
        %v610 = vpop.f32.mrf.mxu0
        %v611 = vadd.f32 %v511, %v610
        %612 = vdwg.mxu0
        %613 = vmatpush.bf16.msra.mxu0 %v582
        %614 = vmatpush.bf16.msra.mxu0 %v580
        %615 = vmatpush.bf16.msra.mxu0 %v578
        %616 = vmatpush.bf16.msra.mxu0 %v576
        %617 = vmatpush.bf16.msra.mxu0 %v574
        %618 = vmatpush.bf16.msra.mxu0 %v572
        %619 = vmatpush.bf16.msra.mxu0 %v570
        %620 = vmatpush.bf16.msra.mxu0 %v568
        %621 = vmatmul.bf16.gmra.mxu0 %v517
        %v622 = vpop.f32.mrf.mxu0
        %v623 = vadd.f32 %v506, %v622
        %v624 = vpop.f32.mrf.mxu0
        %v625 = vadd.f32 %v511, %v624
        %626 = vdwg.mxu0
        %v627 = vld [vmem:[%s6] sm:$0xf]
        %v628 = vld [vmem:[%s6 + $0x4] sm:$0xf]
        %v629 = vld [vmem:[%s6 + $0x8] sm:$0xf]
        %v630 = vld [vmem:[%s6 + $0xc] sm:$0xf]
        %v631 = vld [vmem:[%s6 + $0x10] sm:$0xf]
        %v632 = vld [vmem:[%s6 + $0x14] sm:$0xf]
        %v633 = vld [vmem:[%s6 + $0x18] sm:$0xf]
        %v634 = vld [vmem:[%s6 + $0x1c] sm:$0xf]
        %v635 = vld [vmem:[%s6 + $0x20] sm:$0xf]
        %v636 = vld [vmem:[%s6 + $0x24] sm:$0xf]
        %v637 = vld [vmem:[%s6 + $0x28] sm:$0xf]
        %v638 = vld [vmem:[%s6 + $0x2c] sm:$0xf]
        %v639 = vld [vmem:[%s6 + $0x30] sm:$0xf]
        %v640 = vld [vmem:[%s6 + $0x34] sm:$0xf]
        %v641 = vld [vmem:[%s6 + $0x38] sm:$0xf]
        %v642 = vld [vmem:[%s6 + $0x3c] sm:$0xf]
        %v643 = vld [vmem:[%s7] sm:$0xff]
        %v644 = vld [vmem:[%s7 + $0x8] sm:$0xff]
        %v645 = vld [vmem:[%s7 + $0x10] sm:$0xff]
        %v646 = vld [vmem:[%s7 + $0x18] sm:$0xff]
        %v647 = vld [vmem:[%s7 + $0x20] sm:$0xff]
        %v648 = vld [vmem:[%s7 + $0x28] sm:$0xff]
        %v649 = vld [vmem:[%s7 + $0x30] sm:$0xff]
        %v650 = vld [vmem:[%s7 + $0x38] sm:$0xff]
        %v651 = vld [vmem:[%s7 + $0x40] sm:$0xff]
        %v652 = vld [vmem:[%s7 + $0x48] sm:$0xff]
        %v653 = vld [vmem:[%s7 + $0x50] sm:$0xff]
        %v654 = vld [vmem:[%s7 + $0x58] sm:$0xff]
        %v655 = vld [vmem:[%s7 + $0x60] sm:$0xff]
        %v656 = vld [vmem:[%s7 + $0x68] sm:$0xff]
        %v657 = vld [vmem:[%s7 + $0x70] sm:$0xff]
        %v658 = vld [vmem:[%s7 + $0x78] sm:$0xff]
        %660 = vset.pattern.permute.xlu0 0
        %661 = vperm.xlu0 %660, %v643
        %v662 = vpop.permute.xlu0 %661
        %665 = vset.pattern.permute.xlu0 0
        %666 = vperm.xlu0 %665, %v644
        %v667 = vpop.permute.xlu0 %666
        %670 = vset.pattern.permute.xlu0 0
        %671 = vperm.xlu0 %670, %v645
        %v672 = vpop.permute.xlu0 %671
        %675 = vset.pattern.permute.xlu0 0
        %676 = vperm.xlu0 %675, %v646
        %v677 = vpop.permute.xlu0 %676
        %680 = vset.pattern.permute.xlu0 0
        %681 = vperm.xlu0 %680, %v647
        %v682 = vpop.permute.xlu0 %681
        %685 = vset.pattern.permute.xlu0 0
        %686 = vperm.xlu0 %685, %v648
        %v687 = vpop.permute.xlu0 %686
        %690 = vset.pattern.permute.xlu0 0
        %691 = vperm.xlu0 %690, %v649
        %v692 = vpop.permute.xlu0 %691
        %695 = vset.pattern.permute.xlu0 0
        %696 = vperm.xlu0 %695, %v650
        %v697 = vpop.permute.xlu0 %696
        %700 = vset.pattern.permute.xlu0 0
        %701 = vperm.xlu0 %700, %v651
        %v702 = vpop.permute.xlu0 %701
        %705 = vset.pattern.permute.xlu0 0
        %706 = vperm.xlu0 %705, %v652
        %v707 = vpop.permute.xlu0 %706
        %710 = vset.pattern.permute.xlu0 0
        %711 = vperm.xlu0 %710, %v653
        %v712 = vpop.permute.xlu0 %711
        %715 = vset.pattern.permute.xlu0 0
        %716 = vperm.xlu0 %715, %v654
        %v717 = vpop.permute.xlu0 %716
        %720 = vset.pattern.permute.xlu0 0
        %721 = vperm.xlu0 %720, %v655
        %v722 = vpop.permute.xlu0 %721
        %725 = vset.pattern.permute.xlu0 0
        %726 = vperm.xlu0 %725, %v656
        %v727 = vpop.permute.xlu0 %726
        %730 = vset.pattern.permute.xlu0 0
        %731 = vperm.xlu0 %730, %v657
        %v732 = vpop.permute.xlu0 %731
        %735 = vset.pattern.permute.xlu0 0
        %736 = vperm.xlu0 %735, %v658
        %v737 = vpop.permute.xlu0 %736
        %v755 = vunpack.c.l.b16 %v627
        %v756 = vunpack.c.l.b16 %v628
        %v757 = vunpack.c.l.b16 %v629
        %v758 = vunpack.c.l.b16 %v630
        %v759 = vunpack.c.l.b16 %v631
        %v760 = vunpack.c.l.b16 %v632
        %v761 = vunpack.c.l.b16 %v633
        %v762 = vunpack.c.l.b16 %v634
        %v763 = vunpack.c.l.b16 %v635
        %v764 = vunpack.c.l.b16 %v636
        %v765 = vunpack.c.l.b16 %v637
        %v766 = vunpack.c.l.b16 %v638
        %v767 = vunpack.c.l.b16 %v639
        %v768 = vunpack.c.l.b16 %v640
        %v769 = vunpack.c.l.b16 %v641
        %v770 = vunpack.c.l.b16 %v642
        %v771 = vpack.c.b16 %v756, %v755
        %v772 = vpack.c.b16 %v758, %v757
        %v773 = vpack.c.b16 %v760, %v759
        %v774 = vpack.c.b16 %v762, %v761
        %v775 = vpack.c.b16 %v764, %v763
        %v776 = vpack.c.b16 %v766, %v765
        %v777 = vpack.c.b16 %v768, %v767
        %v778 = vpack.c.b16 %v770, %v769
        %787 = vmatpush.bf16.msra.mxu0 %v581
        %788 = vmatpush.bf16.msra.mxu0 %v579
        %789 = vmatpush.bf16.msra.mxu0 %v577
        %790 = vmatpush.bf16.msra.mxu0 %v575
        %791 = vmatpush.bf16.msra.mxu0 %v573
        %792 = vmatpush.bf16.msra.mxu0 %v571
        %793 = vmatpush.bf16.msra.mxu0 %v569
        %794 = vmatpush.bf16.msra.mxu0 %v567
        %795 = vmatmul.bf16.gmra.mxu0 %v771
        %v796 = vpop.f32.mrf.mxu0
        %v797 = vadd.f32 %v662, %v796
        %v798 = vpop.f32.mrf.mxu0
        %v799 = vadd.f32 %v667, %v798
        %800 = vmatmul.bf16.gmra.mxu0 %v772
        %v801 = vpop.f32.mrf.mxu0
        %v802 = vadd.f32 %v672, %v801
        %v803 = vpop.f32.mrf.mxu0
        %v804 = vadd.f32 %v677, %v803
        %805 = vmatmul.bf16.gmra.mxu0 %v773
        %v806 = vpop.f32.mrf.mxu0
        %v807 = vadd.f32 %v682, %v806
        %v808 = vpop.f32.mrf.mxu0
        %v809 = vadd.f32 %v687, %v808
        %810 = vmatmul.bf16.gmra.mxu0 %v774
        %v811 = vpop.f32.mrf.mxu0
        %v812 = vadd.f32 %v692, %v811
        %v813 = vpop.f32.mrf.mxu0
        %v814 = vadd.f32 %v697, %v813
        %815 = vmatmul.bf16.gmra.mxu0 %v775
        %v816 = vpop.f32.mrf.mxu0
        %v817 = vadd.f32 %v702, %v816
        %v818 = vpop.f32.mrf.mxu0
        %v819 = vadd.f32 %v707, %v818
        %820 = vmatmul.bf16.gmra.mxu0 %v776
        %v821 = vpop.f32.mrf.mxu0
        %v822 = vadd.f32 %v712, %v821
        %v823 = vpop.f32.mrf.mxu0
        %v824 = vadd.f32 %v717, %v823
        %825 = vmatmul.bf16.gmra.mxu0 %v777
        %v826 = vpop.f32.mrf.mxu0
        %v827 = vadd.f32 %v722, %v826
        %v828 = vpop.f32.mrf.mxu0
        %v829 = vadd.f32 %v727, %v828
        %830 = vmatmul.bf16.gmra.mxu0 %v778
        %v831 = vpop.f32.mrf.mxu0
        %v832 = vadd.f32 %v732, %v831
        %v833 = vpop.f32.mrf.mxu0
        %v834 = vadd.f32 %v737, %v833
        %835 = vdwg.mxu0
        %836 = vmatpush.bf16.msra.mxu0 %v582
        %837 = vmatpush.bf16.msra.mxu0 %v580
        %838 = vmatpush.bf16.msra.mxu0 %v578
        %839 = vmatpush.bf16.msra.mxu0 %v576
        %840 = vmatpush.bf16.msra.mxu0 %v574
        %841 = vmatpush.bf16.msra.mxu0 %v572
        %842 = vmatpush.bf16.msra.mxu0 %v570
        %843 = vmatpush.bf16.msra.mxu0 %v568
        %844 = vmatmul.bf16.gmra.mxu0 %v771
        %v845 = vpop.f32.mrf.mxu0
        %v846 = vadd.f32 %v662, %v845
        %v847 = vpop.f32.mrf.mxu0
        %v848 = vadd.f32 %v667, %v847
        %849 = vmatmul.bf16.gmra.mxu0 %v772
        %v850 = vpop.f32.mrf.mxu0
        %v851 = vadd.f32 %v672, %v850
        %v852 = vpop.f32.mrf.mxu0
        %v853 = vadd.f32 %v677, %v852
        %854 = vmatmul.bf16.gmra.mxu0 %v773
        %v855 = vpop.f32.mrf.mxu0
        %v856 = vadd.f32 %v682, %v855
        %v857 = vpop.f32.mrf.mxu0
        %v858 = vadd.f32 %v687, %v857
        %859 = vmatmul.bf16.gmra.mxu0 %v774
        %v860 = vpop.f32.mrf.mxu0
        %v861 = vadd.f32 %v692, %v860
        %v862 = vpop.f32.mrf.mxu0
        %v863 = vadd.f32 %v697, %v862
        %864 = vmatmul.bf16.gmra.mxu0 %v775
        %v865 = vpop.f32.mrf.mxu0
        %v866 = vadd.f32 %v702, %v865
        %v867 = vpop.f32.mrf.mxu0
        %v868 = vadd.f32 %v707, %v867
        %869 = vmatmul.bf16.gmra.mxu0 %v776
        %v870 = vpop.f32.mrf.mxu0
        %v871 = vadd.f32 %v712, %v870
        %v872 = vpop.f32.mrf.mxu0
        %v873 = vadd.f32 %v717, %v872
        %874 = vmatmul.bf16.gmra.mxu0 %v777
        %v875 = vpop.f32.mrf.mxu0
        %v876 = vadd.f32 %v722, %v875
        %v877 = vpop.f32.mrf.mxu0
        %v878 = vadd.f32 %v727, %v877
        %879 = vmatmul.bf16.gmra.mxu0 %v778
        %v880 = vpop.f32.mrf.mxu0
        %v881 = vadd.f32 %v732, %v880
        %v882 = vpop.f32.mrf.mxu0
        %v883 = vadd.f32 %v737, %v882
        %884 = vdwg.mxu0
        %vm885 = vcmask 130048
        %v887 = vsel %vm885, %v460, 0
        %v890 = vsel %vm885, %v462, 0
        %v893 = vsel %vm885, %v465, 0
        %v896 = vsel %vm885, %v467, 0
        %v899 = vsel %vm885, %v470, 0
        %v902 = vsel %vm885, %v472, 0
        %v905 = vsel %vm885, %v475, 0
        %v908 = vsel %vm885, %v477, 0
        %v911 = vsel %vm885, %v480, 0
        %v914 = vsel %vm885, %v482, 0
        %v917 = vsel %vm885, %v485, 0
        %v920 = vsel %vm885, %v487, 0
        %v923 = vsel %vm885, %v490, 0
        %v926 = vsel %vm885, %v492, 0
        %v929 = vsel %vm885, %v495, 0
        %v932 = vsel %vm885, %v497, 0
        %934 = vmatpush.msra.mxu0 0.0
        %935 = vmatpush.msra.mxu0 0.0
        %936 = vmatpush.msra.mxu0 0.0
        %937 = vmatpush.msra.mxu0 0.0
        %938 = vmatpush.msra.mxu0 0.0
        %939 = vmatpush.msra.mxu0 0.0
        %940 = vmatpush.msra.mxu0 0.0
        %941 = vmatpush.msra.mxu0 0.0
        %942 = vmatpush.msra.mxu0 0.0
        %943 = vmatpush.msra.mxu0 0.0
        %944 = vmatpush.msra.mxu0 0.0
        %945 = vmatpush.msra.mxu0 0.0
        %946 = vmatpush.msra.mxu0 0.0
        %947 = vmatpush.msra.mxu0 0.0
        %948 = vmatpush.msra.mxu0 %v611
        %949 = vmatpush.msra.mxu0 %v609
        %950 = vmatmul.f32.gmra.mxu0 %v887
        %v951 = vpop.f32.mrf.mxu0
        %v952 = vadd.f32 0.0, %v951
        %953 = vmatmul.f32.gmra.mxu0 %v890
        %v954 = vpop.f32.mrf.mxu0
        %v955 = vadd.f32 0.0, %v954
        %956 = vmatmul.f32.gmra.mxu0 %v893
        %v957 = vpop.f32.mrf.mxu0
        %v958 = vadd.f32 0.0, %v957
        %959 = vmatmul.f32.gmra.mxu0 %v896
        %v960 = vpop.f32.mrf.mxu0
        %v961 = vadd.f32 0.0, %v960
        %962 = vmatmul.f32.gmra.mxu0 %v899
        %v963 = vpop.f32.mrf.mxu0
        %v964 = vadd.f32 0.0, %v963
        %965 = vmatmul.f32.gmra.mxu0 %v902
        %v966 = vpop.f32.mrf.mxu0
        %v967 = vadd.f32 0.0, %v966
        %968 = vmatmul.f32.gmra.mxu0 %v905
        %v969 = vpop.f32.mrf.mxu0
        %v970 = vadd.f32 0.0, %v969
        %971 = vmatmul.f32.gmra.mxu0 %v908
        %v972 = vpop.f32.mrf.mxu0
        %v973 = vadd.f32 0.0, %v972
        %974 = vmatmul.f32.gmra.mxu0 %v911
        %v975 = vpop.f32.mrf.mxu0
        %v976 = vadd.f32 0.0, %v975
        %977 = vmatmul.f32.gmra.mxu0 %v914
        %v978 = vpop.f32.mrf.mxu0
        %v979 = vadd.f32 0.0, %v978
        %980 = vmatmul.f32.gmra.mxu0 %v917
        %v981 = vpop.f32.mrf.mxu0
        %v982 = vadd.f32 0.0, %v981
        %983 = vmatmul.f32.gmra.mxu0 %v920
        %v984 = vpop.f32.mrf.mxu0
        %v985 = vadd.f32 0.0, %v984
        %986 = vmatmul.f32.gmra.mxu0 %v923
        %v987 = vpop.f32.mrf.mxu0
        %v988 = vadd.f32 0.0, %v987
        %989 = vmatmul.f32.gmra.mxu0 %v926
        %v990 = vpop.f32.mrf.mxu0
        %v991 = vadd.f32 0.0, %v990
        %992 = vmatmul.f32.gmra.mxu0 %v929
        %v993 = vpop.f32.mrf.mxu0
        %v994 = vadd.f32 0.0, %v993
        %995 = vmatmul.f32.gmra.mxu0 %v932
        %v996 = vpop.f32.mrf.mxu0
        %v997 = vadd.f32 0.0, %v996
        %998 = vdwg.mxu0
        %999 = vmatpush.msra.mxu0 0.0
        %1000 = vmatpush.msra.mxu0 0.0
        %1001 = vmatpush.msra.mxu0 0.0
        %1002 = vmatpush.msra.mxu0 0.0
        %1003 = vmatpush.msra.mxu0 0.0
        %1004 = vmatpush.msra.mxu0 0.0
        %1005 = vmatpush.msra.mxu0 0.0
        %1006 = vmatpush.msra.mxu0 0.0
        %1007 = vmatpush.msra.mxu0 0.0
        %1008 = vmatpush.msra.mxu0 0.0
        %1009 = vmatpush.msra.mxu0 0.0
        %1010 = vmatpush.msra.mxu0 0.0
        %1011 = vmatpush.msra.mxu0 0.0
        %1012 = vmatpush.msra.mxu0 0.0
        %1013 = vmatpush.msra.mxu0 %v625
        %1014 = vmatpush.msra.mxu0 %v623
        %1015 = vmatmul.f32.gmra.mxu0 %v887
        %v1016 = vpop.f32.mrf.mxu0
        %v1017 = vadd.f32 0.0, %v1016
        %1018 = vmatmul.f32.gmra.mxu0 %v890
        %v1019 = vpop.f32.mrf.mxu0
        %v1020 = vadd.f32 0.0, %v1019
        %1021 = vmatmul.f32.gmra.mxu0 %v893
        %v1022 = vpop.f32.mrf.mxu0
        %v1023 = vadd.f32 0.0, %v1022
        %1024 = vmatmul.f32.gmra.mxu0 %v896
        %v1025 = vpop.f32.mrf.mxu0
        %v1026 = vadd.f32 0.0, %v1025
        %1027 = vmatmul.f32.gmra.mxu0 %v899
        %v1028 = vpop.f32.mrf.mxu0
        %v1029 = vadd.f32 0.0, %v1028
        %1030 = vmatmul.f32.gmra.mxu0 %v902
        %v1031 = vpop.f32.mrf.mxu0
        %v1032 = vadd.f32 0.0, %v1031
        %1033 = vmatmul.f32.gmra.mxu0 %v905
        %v1034 = vpop.f32.mrf.mxu0
        %v1035 = vadd.f32 0.0, %v1034
        %1036 = vmatmul.f32.gmra.mxu0 %v908
        %v1037 = vpop.f32.mrf.mxu0
        %v1038 = vadd.f32 0.0, %v1037
        %1039 = vmatmul.f32.gmra.mxu0 %v911
        %v1040 = vpop.f32.mrf.mxu0
        %v1041 = vadd.f32 0.0, %v1040
        %1042 = vmatmul.f32.gmra.mxu0 %v914
        %v1043 = vpop.f32.mrf.mxu0
        %v1044 = vadd.f32 0.0, %v1043
        %1045 = vmatmul.f32.gmra.mxu0 %v917
        %v1046 = vpop.f32.mrf.mxu0
        %v1047 = vadd.f32 0.0, %v1046
        %1048 = vmatmul.f32.gmra.mxu0 %v920
        %v1049 = vpop.f32.mrf.mxu0
        %v1050 = vadd.f32 0.0, %v1049
        %1051 = vmatmul.f32.gmra.mxu0 %v923
        %v1052 = vpop.f32.mrf.mxu0
        %v1053 = vadd.f32 0.0, %v1052
        %1054 = vmatmul.f32.gmra.mxu0 %v926
        %v1055 = vpop.f32.mrf.mxu0
        %v1056 = vadd.f32 0.0, %v1055
        %1057 = vmatmul.f32.gmra.mxu0 %v929
        %v1058 = vpop.f32.mrf.mxu0
        %v1059 = vadd.f32 0.0, %v1058
        %1060 = vmatmul.f32.gmra.mxu0 %v932
        %v1061 = vpop.f32.mrf.mxu0
        %v1062 = vadd.f32 0.0, %v1061
        %1063 = vdwg.mxu0
        %v1064 = vmul.f32 %v952, 0.25
        %v1065 = vmul.f32 %v1017, 0.25
        %v1066 = vmul.f32 %v955, 0.25
        %v1067 = vmul.f32 %v1020, 0.25
        %v1068 = vmul.f32 %v958, 0.25
        %v1069 = vmul.f32 %v1023, 0.25
        %v1070 = vmul.f32 %v961, 0.25
        %v1071 = vmul.f32 %v1026, 0.25
        %v1072 = vmul.f32 %v964, 0.25
        %v1073 = vmul.f32 %v1029, 0.25
        %v1074 = vmul.f32 %v967, 0.25
        %v1075 = vmul.f32 %v1032, 0.25
        %v1076 = vmul.f32 %v970, 0.25
        %v1077 = vmul.f32 %v1035, 0.25
        %v1078 = vmul.f32 %v973, 0.25
        %v1079 = vmul.f32 %v1038, 0.25
        %v1080 = vmul.f32 %v976, 0.25
        %v1081 = vmul.f32 %v1041, 0.25
        %v1082 = vmul.f32 %v979, 0.25
        %v1083 = vmul.f32 %v1044, 0.25
        %v1084 = vmul.f32 %v982, 0.25
        %v1085 = vmul.f32 %v1047, 0.25
        %v1086 = vmul.f32 %v985, 0.25
        %v1087 = vmul.f32 %v1050, 0.25
        %v1088 = vmul.f32 %v988, 0.25
        %v1089 = vmul.f32 %v1053, 0.25
        %v1090 = vmul.f32 %v991, 0.25
        %v1091 = vmul.f32 %v1056, 0.25
        %v1092 = vmul.f32 %v994, 0.25
        %v1093 = vmul.f32 %v1059, 0.25
        %v1094 = vmul.f32 %v997, 0.25
        %v1095 = vmul.f32 %v1062, 0.25
        %v1096 = vmax.f32 %v1064, %v1065
        %1097 = vmax.xlane.f32.xlu0 %v1096
        %v1098 = vpop.xlane.xlu0 %1097
        %v1099 = vmax.f32 %v1066, %v1067
        %1100 = vmax.xlane.f32.xlu0 %v1099
        %v1101 = vpop.xlane.xlu0 %1100
        %v1102 = vmax.f32 %v1068, %v1069
        %1103 = vmax.xlane.f32.xlu0 %v1102
        %v1104 = vpop.xlane.xlu0 %1103
        %v1105 = vmax.f32 %v1070, %v1071
        %1106 = vmax.xlane.f32.xlu0 %v1105
        %v1107 = vpop.xlane.xlu0 %1106
        %v1108 = vmax.f32 %v1072, %v1073
        %1109 = vmax.xlane.f32.xlu0 %v1108
        %v1110 = vpop.xlane.xlu0 %1109
        %v1111 = vmax.f32 %v1074, %v1075
        %1112 = vmax.xlane.f32.xlu0 %v1111
        %v1113 = vpop.xlane.xlu0 %1112
        %v1114 = vmax.f32 %v1076, %v1077
        %1115 = vmax.xlane.f32.xlu0 %v1114
        %v1116 = vpop.xlane.xlu0 %1115
        %v1117 = vmax.f32 %v1078, %v1079
        %1118 = vmax.xlane.f32.xlu0 %v1117
        %v1119 = vpop.xlane.xlu0 %1118
        %v1120 = vmax.f32 %v1080, %v1081
        %1121 = vmax.xlane.f32.xlu0 %v1120
        %v1122 = vpop.xlane.xlu0 %1121
        %v1123 = vmax.f32 %v1082, %v1083
        %1124 = vmax.xlane.f32.xlu0 %v1123
        %v1125 = vpop.xlane.xlu0 %1124
        %v1126 = vmax.f32 %v1084, %v1085
        %1127 = vmax.xlane.f32.xlu0 %v1126
        %v1128 = vpop.xlane.xlu0 %1127
        %v1129 = vmax.f32 %v1086, %v1087
        %1130 = vmax.xlane.f32.xlu0 %v1129
        %v1131 = vpop.xlane.xlu0 %1130
        %v1132 = vmax.f32 %v1088, %v1089
        %1133 = vmax.xlane.f32.xlu0 %v1132
        %v1134 = vpop.xlane.xlu0 %1133
        %v1135 = vmax.f32 %v1090, %v1091
        %1136 = vmax.xlane.f32.xlu0 %v1135
        %v1137 = vpop.xlane.xlu0 %1136
        %v1138 = vmax.f32 %v1092, %v1093
        %1139 = vmax.xlane.f32.xlu0 %v1138
        %v1140 = vpop.xlane.xlu0 %1139
        %v1141 = vmax.f32 %v1094, %v1095
        %1142 = vmax.xlane.f32.xlu0 %v1141
        %v1143 = vpop.xlane.xlu0 %1142
        %v1144 = vsub.f32 %v1064, %v1098
        %v1145 = vsub.f32 %v1065, %v1098
        %v1146 = vsub.f32 %v1066, %v1101
        %v1147 = vsub.f32 %v1067, %v1101
        %v1148 = vsub.f32 %v1068, %v1104
        %v1149 = vsub.f32 %v1069, %v1104
        %v1150 = vsub.f32 %v1070, %v1107
        %v1151 = vsub.f32 %v1071, %v1107
        %v1152 = vsub.f32 %v1072, %v1110
        %v1153 = vsub.f32 %v1073, %v1110
        %v1154 = vsub.f32 %v1074, %v1113
        %v1155 = vsub.f32 %v1075, %v1113
        %v1156 = vsub.f32 %v1076, %v1116
        %v1157 = vsub.f32 %v1077, %v1116
        %v1158 = vsub.f32 %v1078, %v1119
        %v1159 = vsub.f32 %v1079, %v1119
        %v1160 = vsub.f32 %v1080, %v1122
        %v1161 = vsub.f32 %v1081, %v1122
        %v1162 = vsub.f32 %v1082, %v1125
        %v1163 = vsub.f32 %v1083, %v1125
        %v1164 = vsub.f32 %v1084, %v1128
        %v1165 = vsub.f32 %v1085, %v1128
        %v1166 = vsub.f32 %v1086, %v1131
        %v1167 = vsub.f32 %v1087, %v1131
        %v1168 = vsub.f32 %v1088, %v1134
        %v1169 = vsub.f32 %v1089, %v1134
        %v1170 = vsub.f32 %v1090, %v1137
        %v1171 = vsub.f32 %v1091, %v1137
        %v1172 = vsub.f32 %v1092, %v1140
        %v1173 = vsub.f32 %v1093, %v1140
        %v1174 = vsub.f32 %v1094, %v1143
        %v1175 = vsub.f32 %v1095, %v1143
        %v1176 = vmul.f32 %v1144, 1.442695
        %v1177 = vpow.pop %v1176
        %v1178 = vmul.f32 %v1145, 1.442695
        %v1179 = vpow.pop %v1178
        %v1180 = vmul.f32 %v1146, 1.442695
        %v1181 = vpow.pop %v1180
        %v1182 = vmul.f32 %v1147, 1.442695
        %v1183 = vpow.pop %v1182
        %v1184 = vmul.f32 %v1148, 1.442695
        %v1185 = vpow.pop %v1184
        %v1186 = vmul.f32 %v1149, 1.442695
        %v1187 = vpow.pop %v1186
        %v1188 = vmul.f32 %v1150, 1.442695
        %v1189 = vpow.pop %v1188
        %v1190 = vmul.f32 %v1151, 1.442695
        %v1191 = vpow.pop %v1190
        %v1192 = vmul.f32 %v1152, 1.442695
        %v1193 = vpow.pop %v1192
        %v1194 = vmul.f32 %v1153, 1.442695
        %v1195 = vpow.pop %v1194
        %v1196 = vmul.f32 %v1154, 1.442695
        %v1197 = vpow.pop %v1196
        %v1198 = vmul.f32 %v1155, 1.442695
        %v1199 = vpow.pop %v1198
        %v1200 = vmul.f32 %v1156, 1.442695
        %v1201 = vpow.pop %v1200
        %v1202 = vmul.f32 %v1157, 1.442695
        %v1203 = vpow.pop %v1202
        %v1204 = vmul.f32 %v1158, 1.442695
        %v1205 = vpow.pop %v1204
        %v1206 = vmul.f32 %v1159, 1.442695
        %v1207 = vpow.pop %v1206
        %v1208 = vmul.f32 %v1160, 1.442695
        %v1209 = vpow.pop %v1208
        %v1210 = vmul.f32 %v1161, 1.442695
        %v1211 = vpow.pop %v1210
        %v1212 = vmul.f32 %v1162, 1.442695
        %v1213 = vpow.pop %v1212
        %v1214 = vmul.f32 %v1163, 1.442695
        %v1215 = vpow.pop %v1214
        %v1216 = vmul.f32 %v1164, 1.442695
        %v1217 = vpow.pop %v1216
        %v1218 = vmul.f32 %v1165, 1.442695
        %v1219 = vpow.pop %v1218
        %v1220 = vmul.f32 %v1166, 1.442695
        %v1221 = vpow.pop %v1220
        %v1222 = vmul.f32 %v1167, 1.442695
        %v1223 = vpow.pop %v1222
        %v1224 = vmul.f32 %v1168, 1.442695
        %v1225 = vpow.pop %v1224
        %v1226 = vmul.f32 %v1169, 1.442695
        %v1227 = vpow.pop %v1226
        %v1228 = vmul.f32 %v1170, 1.442695
        %v1229 = vpow.pop %v1228
        %v1230 = vmul.f32 %v1171, 1.442695
        %v1231 = vpow.pop %v1230
        %v1232 = vmul.f32 %v1172, 1.442695
        %v1233 = vpow.pop %v1232
        %v1234 = vmul.f32 %v1173, 1.442695
        %v1235 = vpow.pop %v1234
        %v1236 = vmul.f32 %v1174, 1.442695
        %v1237 = vpow.pop %v1236
        %v1238 = vmul.f32 %v1175, 1.442695
        %v1239 = vpow.pop %v1238
        %v1240 = vadd.f32 %v1177, %v1179
        %1241 = vadd.xlane.f32.xlu0 %v1240
        %v1242 = vpop.xlane.xlu0 %1241
        %v1243 = vadd.f32 %v1181, %v1183
        %1244 = vadd.xlane.f32.xlu0 %v1243
        %v1245 = vpop.xlane.xlu0 %1244
        %v1246 = vadd.f32 %v1185, %v1187
        %1247 = vadd.xlane.f32.xlu0 %v1246
        %v1248 = vpop.xlane.xlu0 %1247
        %v1249 = vadd.f32 %v1189, %v1191
        %1250 = vadd.xlane.f32.xlu0 %v1249
        %v1251 = vpop.xlane.xlu0 %1250
        %v1252 = vadd.f32 %v1193, %v1195
        %1253 = vadd.xlane.f32.xlu0 %v1252
        %v1254 = vpop.xlane.xlu0 %1253
        %v1255 = vadd.f32 %v1197, %v1199
        %1256 = vadd.xlane.f32.xlu0 %v1255
        %v1257 = vpop.xlane.xlu0 %1256
        %v1258 = vadd.f32 %v1201, %v1203
        %1259 = vadd.xlane.f32.xlu0 %v1258
        %v1260 = vpop.xlane.xlu0 %1259
        %v1261 = vadd.f32 %v1205, %v1207
        %1262 = vadd.xlane.f32.xlu0 %v1261
        %v1263 = vpop.xlane.xlu0 %1262
        %v1264 = vadd.f32 %v1209, %v1211
        %1265 = vadd.xlane.f32.xlu0 %v1264
        %v1266 = vpop.xlane.xlu0 %1265
        %v1267 = vadd.f32 %v1213, %v1215
        %1268 = vadd.xlane.f32.xlu0 %v1267
        %v1269 = vpop.xlane.xlu0 %1268
        %v1270 = vadd.f32 %v1217, %v1219
        %1271 = vadd.xlane.f32.xlu0 %v1270
        %v1272 = vpop.xlane.xlu0 %1271
        %v1273 = vadd.f32 %v1221, %v1223
        %1274 = vadd.xlane.f32.xlu0 %v1273
        %v1275 = vpop.xlane.xlu0 %1274
        %v1276 = vadd.f32 %v1225, %v1227
        %1277 = vadd.xlane.f32.xlu0 %v1276
        %v1278 = vpop.xlane.xlu0 %1277
        %v1279 = vadd.f32 %v1229, %v1231
        %1280 = vadd.xlane.f32.xlu0 %v1279
        %v1281 = vpop.xlane.xlu0 %1280
        %v1282 = vadd.f32 %v1233, %v1235
        %1283 = vadd.xlane.f32.xlu0 %v1282
        %v1284 = vpop.xlane.xlu0 %1283
        %v1285 = vadd.f32 %v1237, %v1239
        %1286 = vadd.xlane.f32.xlu0 %v1285
        %v1287 = vpop.xlane.xlu0 %1286
        %v1288 = vrcp.pop %v1242
        %v1289 = vrcp.pop %v1245
        %v1290 = vrcp.pop %v1248
        %v1291 = vrcp.pop %v1251
        %v1292 = vrcp.pop %v1254
        %v1293 = vrcp.pop %v1257
        %v1294 = vrcp.pop %v1260
        %v1295 = vrcp.pop %v1263
        %v1296 = vrcp.pop %v1266
        %v1297 = vrcp.pop %v1269
        %v1298 = vrcp.pop %v1272
        %v1299 = vrcp.pop %v1275
        %v1300 = vrcp.pop %v1278
        %v1301 = vrcp.pop %v1281
        %v1302 = vrcp.pop %v1284
        %v1303 = vrcp.pop %v1287
        %v1304 = vmul.f32 %v1177, %v1288
        %v1305 = vmul.f32 %v1179, %v1288
        %v1306 = vmul.f32 %v1181, %v1289
        %v1307 = vmul.f32 %v1183, %v1289
        %v1308 = vmul.f32 %v1185, %v1290
        %v1309 = vmul.f32 %v1187, %v1290
        %v1310 = vmul.f32 %v1189, %v1291
        %v1311 = vmul.f32 %v1191, %v1291
        %v1312 = vmul.f32 %v1193, %v1292
        %v1313 = vmul.f32 %v1195, %v1292
        %v1314 = vmul.f32 %v1197, %v1293
        %v1315 = vmul.f32 %v1199, %v1293
        %v1316 = vmul.f32 %v1201, %v1294
        %v1317 = vmul.f32 %v1203, %v1294
        %v1318 = vmul.f32 %v1205, %v1295
        %v1319 = vmul.f32 %v1207, %v1295
        %v1320 = vmul.f32 %v1209, %v1296
        %v1321 = vmul.f32 %v1211, %v1296
        %v1322 = vmul.f32 %v1213, %v1297
        %v1323 = vmul.f32 %v1215, %v1297
        %v1324 = vmul.f32 %v1217, %v1298
        %v1325 = vmul.f32 %v1219, %v1298
        %v1326 = vmul.f32 %v1221, %v1299
        %v1327 = vmul.f32 %v1223, %v1299
        %v1328 = vmul.f32 %v1225, %v1300
        %v1329 = vmul.f32 %v1227, %v1300
        %v1330 = vmul.f32 %v1229, %v1301
        %v1331 = vmul.f32 %v1231, %v1301
        %v1332 = vmul.f32 %v1233, %v1302
        %v1333 = vmul.f32 %v1235, %v1302
        %v1334 = vmul.f32 %v1237, %v1303
        %v1335 = vmul.f32 %v1239, %v1303
        %v1336 = vpack.c.bf16 %v799, %v797
        %v1337 = vpack.c.bf16 %v848, %v846
        %v1338 = vpack.c.bf16 %v804, %v802
        %v1339 = vpack.c.bf16 %v853, %v851
        %v1340 = vpack.c.bf16 %v809, %v807
        %v1341 = vpack.c.bf16 %v858, %v856
        %v1342 = vpack.c.bf16 %v814, %v812
        %v1343 = vpack.c.bf16 %v863, %v861
        %v1344 = vpack.c.bf16 %v819, %v817
        %v1345 = vpack.c.bf16 %v868, %v866
        %v1346 = vpack.c.bf16 %v824, %v822
        %v1347 = vpack.c.bf16 %v873, %v871
        %v1348 = vpack.c.bf16 %v829, %v827
        %v1349 = vpack.c.bf16 %v878, %v876
        %v1350 = vpack.c.bf16 %v834, %v832
        %v1351 = vpack.c.bf16 %v883, %v881
        %v1352 = vpack.c.bf16 %v1306, %v1304
        %v1353 = vpack.c.bf16 %v1307, %v1305
        %v1354 = vpack.c.bf16 %v1310, %v1308
        %v1355 = vpack.c.bf16 %v1311, %v1309
        %v1356 = vpack.c.bf16 %v1314, %v1312
        %v1357 = vpack.c.bf16 %v1315, %v1313
        %v1358 = vpack.c.bf16 %v1318, %v1316
        %v1359 = vpack.c.bf16 %v1319, %v1317
        %v1360 = vpack.c.bf16 %v1322, %v1320
        %v1361 = vpack.c.bf16 %v1323, %v1321
        %v1362 = vpack.c.bf16 %v1326, %v1324
        %v1363 = vpack.c.bf16 %v1327, %v1325
        %v1364 = vpack.c.bf16 %v1330, %v1328
        %v1365 = vpack.c.bf16 %v1331, %v1329
        %v1366 = vpack.c.bf16 %v1334, %v1332
        %v1367 = vpack.c.bf16 %v1335, %v1333
        %1368 = vmatpush.bf16.xpose.msra.mxu0 %v1366
        %1369 = vmatpush.bf16.xpose.msra.mxu0 %v1364
        %1370 = vmatpush.bf16.xpose.msra.mxu0 %v1362
        %1371 = vmatpush.bf16.xpose.msra.mxu0 %v1360
        %1372 = vmatpush.bf16.xpose.msra.mxu0 %v1358
        %1373 = vmatpush.bf16.xpose.msra.mxu0 %v1356
        %1374 = vmatpush.bf16.xpose.msra.mxu0 %v1354
        %1375 = vmatpush.bf16.xpose.msra.mxu0 %v1352
        %1376 = vmatmul.bf16.gmra.mxu0 %v1336
        %v1377 = vpop.f32.mrf.mxu0
        %v1378 = vadd.f32 0.0, %v1377
        %v1379 = vpop.f32.mrf.mxu0
        %v1380 = vadd.f32 0.0, %v1379
        %1381 = vmatmul.bf16.gmra.mxu0 %v1338
        %v1382 = vpop.f32.mrf.mxu0
        %v1383 = vadd.f32 0.0, %v1382
        %v1384 = vpop.f32.mrf.mxu0
        %v1385 = vadd.f32 0.0, %v1384
        %1386 = vmatmul.bf16.gmra.mxu0 %v1340
        %v1387 = vpop.f32.mrf.mxu0
        %v1388 = vadd.f32 0.0, %v1387
        %v1389 = vpop.f32.mrf.mxu0
        %v1390 = vadd.f32 0.0, %v1389
        %1391 = vmatmul.bf16.gmra.mxu0 %v1342
        %v1392 = vpop.f32.mrf.mxu0
        %v1393 = vadd.f32 0.0, %v1392
        %v1394 = vpop.f32.mrf.mxu0
        %v1395 = vadd.f32 0.0, %v1394
        %1396 = vmatmul.bf16.gmra.mxu0 %v1344
        %v1397 = vpop.f32.mrf.mxu0
        %v1398 = vadd.f32 0.0, %v1397
        %v1399 = vpop.f32.mrf.mxu0
        %v1400 = vadd.f32 0.0, %v1399
        %1401 = vmatmul.bf16.gmra.mxu0 %v1346
        %v1402 = vpop.f32.mrf.mxu0
        %v1403 = vadd.f32 0.0, %v1402
        %v1404 = vpop.f32.mrf.mxu0
        %v1405 = vadd.f32 0.0, %v1404
        %1406 = vmatmul.bf16.gmra.mxu0 %v1348
        %v1407 = vpop.f32.mrf.mxu0
        %v1408 = vadd.f32 0.0, %v1407
        %v1409 = vpop.f32.mrf.mxu0
        %v1410 = vadd.f32 0.0, %v1409
        %1411 = vmatmul.bf16.gmra.mxu0 %v1350
        %v1412 = vpop.f32.mrf.mxu0
        %v1413 = vadd.f32 0.0, %v1412
        %v1414 = vpop.f32.mrf.mxu0
        %v1415 = vadd.f32 0.0, %v1414
        %1416 = vdwg.mxu0
        %1417 = vmatpush.bf16.xpose.msra.mxu0 %v1367
        %1418 = vmatpush.bf16.xpose.msra.mxu0 %v1365
        %1419 = vmatpush.bf16.xpose.msra.mxu0 %v1363
        %1420 = vmatpush.bf16.xpose.msra.mxu0 %v1361
        %1421 = vmatpush.bf16.xpose.msra.mxu0 %v1359
        %1422 = vmatpush.bf16.xpose.msra.mxu0 %v1357
        %1423 = vmatpush.bf16.xpose.msra.mxu0 %v1355
        %1424 = vmatpush.bf16.xpose.msra.mxu0 %v1353
        %1425 = vmatmul.bf16.gmra.mxu0 %v1337
        %v1426 = vpop.f32.mrf.mxu0
        %v1427 = vadd.f32 %v1378, %v1426
        %v1428 = vpop.f32.mrf.mxu0
        %v1429 = vadd.f32 %v1380, %v1428
        %1430 = vmatmul.bf16.gmra.mxu0 %v1339
        %v1431 = vpop.f32.mrf.mxu0
        %v1432 = vadd.f32 %v1383, %v1431
        %v1433 = vpop.f32.mrf.mxu0
        %v1434 = vadd.f32 %v1385, %v1433
        %1435 = vmatmul.bf16.gmra.mxu0 %v1341
        %v1436 = vpop.f32.mrf.mxu0
        %v1437 = vadd.f32 %v1388, %v1436
        %v1438 = vpop.f32.mrf.mxu0
        %v1439 = vadd.f32 %v1390, %v1438
        %1440 = vmatmul.bf16.gmra.mxu0 %v1343
        %v1441 = vpop.f32.mrf.mxu0
        %v1442 = vadd.f32 %v1393, %v1441
        %v1443 = vpop.f32.mrf.mxu0
        %v1444 = vadd.f32 %v1395, %v1443
        %1445 = vmatmul.bf16.gmra.mxu0 %v1345
        %v1446 = vpop.f32.mrf.mxu0
        %v1447 = vadd.f32 %v1398, %v1446
        %v1448 = vpop.f32.mrf.mxu0
        %v1449 = vadd.f32 %v1400, %v1448
        %1450 = vmatmul.bf16.gmra.mxu0 %v1347
        %v1451 = vpop.f32.mrf.mxu0
        %v1452 = vadd.f32 %v1403, %v1451
        %v1453 = vpop.f32.mrf.mxu0
        %v1454 = vadd.f32 %v1405, %v1453
        %1455 = vmatmul.bf16.gmra.mxu0 %v1349
        %v1456 = vpop.f32.mrf.mxu0
        %v1457 = vadd.f32 %v1408, %v1456
        %v1458 = vpop.f32.mrf.mxu0
        %v1459 = vadd.f32 %v1410, %v1458
        %1460 = vmatmul.bf16.gmra.mxu0 %v1351
        %v1461 = vpop.f32.mrf.mxu0
        %v1462 = vadd.f32 %v1413, %v1461
        %v1463 = vpop.f32.mrf.mxu0
        %v1464 = vadd.f32 %v1415, %v1463
        %1465 = vdwg.mxu0
        %1466 = vst [vmem:[%s295] sm:$0xff] %v1427
        %1467 = vst [vmem:[%s295 + $0x8] sm:$0xff] %v1429
        %1468 = vst [vmem:[%s295 + $0x10] sm:$0xff] %v1432
        %1469 = vst [vmem:[%s295 + $0x18] sm:$0xff] %v1434
        %1470 = vst [vmem:[%s295 + $0x20] sm:$0xff] %v1437
        %1471 = vst [vmem:[%s295 + $0x28] sm:$0xff] %v1439
        %1472 = vst [vmem:[%s295 + $0x30] sm:$0xff] %v1442
        %1473 = vst [vmem:[%s295 + $0x38] sm:$0xff] %v1444
        %1474 = vst [vmem:[%s295 + $0x40] sm:$0xff] %v1447
        %1475 = vst [vmem:[%s295 + $0x48] sm:$0xff] %v1449
        %1476 = vst [vmem:[%s295 + $0x50] sm:$0xff] %v1452
        %1477 = vst [vmem:[%s295 + $0x58] sm:$0xff] %v1454
        %1478 = vst [vmem:[%s295 + $0x60] sm:$0xff] %v1457
        %1479 = vst [vmem:[%s295 + $0x68] sm:$0xff] %v1459
        %1480 = vst [vmem:[%s295 + $0x70] sm:$0xff] %v1462
        %1481 = vst [vmem:[%s295 + $0x78] sm:$0xff] %v1464
        %s1482 = sand.u32 %s200, 1
        %s1483 = sand.u32 %s200, 1
        %s1484 = smul.addr %s1483, 128
        %s1485 = scalar_lea.vmem [#allocation2], %s1484
        // Predicated region
        $region53: #{feature_blending_forward.1} parent=51 // pred_check
          %p1486 = pneg %p210
        $region54: #{feature_blending_forward.1} parent=51 // pred_check_branch
          %1488 = sbr.rel (%p1486) target = $region56
        $region55: #{feature_blending_forward.1} parent=51 // pred_region
          %s1489 = smul.addr %s19, 8
          %s1490 = scalar_lea.vmem %s8, %s1489
          // Predicated region
          $region57: #{feature_blending_forward.1} parent=55 // pred_check
            _
          $region58: #{feature_blending_forward.1} parent=55 // pred_check_branch
            %1492 = sbr.rel (0) target = $region60
          $region59: #{feature_blending_forward.1} parent=55 // pred_region
            // Predicated region
            $region61: #{feature_blending_forward.1} parent=59 // pred_check
              _
            $region62: #{feature_blending_forward.1} parent=59 // pred_check_branch
              %1494 = sbr.rel (0) target = $region64
            $region63: #{feature_blending_forward.1} parent=59 // pred_region
              // Predicated region
              $region76: #{feature_blending_forward.1} parent=63 // pred_check
                _
              $region77: #{feature_blending_forward.1} parent=63 // pred_check_branch
                %1540 = sbr.rel (0) target = $region79
              $region78: #{feature_blending_forward.1} parent=63 // pred_region
                loop: start=0, step=1, limit=1
                $region80: #{feature_blending_forward.1} parent=78 // loop_pre_header
                  _
                $region81: #{feature_blending_forward.1} parent=78 // loop_header
                  %s1542 = sphi 0, %s1546
                  %p1543 = scmp.ge.s32.totalorder %s1542, 1
                  %s1547 = sphi %s1485, %s1485
                  %s1548 = sphi %s1490, %s1490
                $region82: #{feature_blending_forward.1} parent=78 // loop_header_branch
                  %1545 = sbr.rel (%p1543) target = $region86
                $region83: #{feature_blending_forward.1} parent=78 // loop_body
                  %v1549 = vld [vmem:[%s1547] sm:$0xff]
                  %1550 = vst [vmem:[%s1548] sm:$0xff] %v1549
                  %v1551 = vld [vmem:[%s1547 + $0x8] sm:$0xff]
                  %1552 = vst [vmem:[%s1548 + $0x10] sm:$0xff] %v1551
                  %v1553 = vld [vmem:[%s1547 + $0x10] sm:$0xff]
                  %1554 = vst [vmem:[%s1548 + $0x20] sm:$0xff] %v1553
                  %v1555 = vld [vmem:[%s1547 + $0x18] sm:$0xff]
                  %1556 = vst [vmem:[%s1548 + $0x30] sm:$0xff] %v1555
                  %v1557 = vld [vmem:[%s1547 + $0x20] sm:$0xff]
                  %1558 = vst [vmem:[%s1548 + $0x40] sm:$0xff] %v1557
                  %v1559 = vld [vmem:[%s1547 + $0x28] sm:$0xff]
                  %1560 = vst [vmem:[%s1548 + $0x50] sm:$0xff] %v1559
                  %v1561 = vld [vmem:[%s1547 + $0x30] sm:$0xff]
                  %1562 = vst [vmem:[%s1548 + $0x60] sm:$0xff] %v1561
                  %v1563 = vld [vmem:[%s1547 + $0x38] sm:$0xff]
                  %1564 = vst [vmem:[%s1548 + $0x70] sm:$0xff] %v1563
                  %v1565 = vld [vmem:[%s1547 + $0x40] sm:$0xff]
                  %1566 = vst [vmem:[%s1548 + $0x80] sm:$0xff] %v1565
                  %v1567 = vld [vmem:[%s1547 + $0x48] sm:$0xff]
                  %1568 = vst [vmem:[%s1548 + $0x90] sm:$0xff] %v1567
                  %v1569 = vld [vmem:[%s1547 + $0x50] sm:$0xff]
                  %1570 = vst [vmem:[%s1548 + $0xa0] sm:$0xff] %v1569
                  %v1571 = vld [vmem:[%s1547 + $0x58] sm:$0xff]
                  %1572 = vst [vmem:[%s1548 + $0xb0] sm:$0xff] %v1571
                  %v1573 = vld [vmem:[%s1547 + $0x60] sm:$0xff]
                  %1574 = vst [vmem:[%s1548 + $0xc0] sm:$0xff] %v1573
                  %v1575 = vld [vmem:[%s1547 + $0x68] sm:$0xff]
                  %1576 = vst [vmem:[%s1548 + $0xd0] sm:$0xff] %v1575
                  %v1577 = vld [vmem:[%s1547 + $0x70] sm:$0xff]
                  %1578 = vst [vmem:[%s1548 + $0xe0] sm:$0xff] %v1577
                  %v1579 = vld [vmem:[%s1547 + $0x78] sm:$0xff]
                  %1580 = vst [vmem:[%s1548 + $0xf0] sm:$0xff] %v1579
                $region84: #{feature_blending_forward.1} parent=78 // loop_footer
                  %s1546 = sadd.s32 1, %s1542
                $region85: #{feature_blending_forward.1} parent=78 // loop_footer_branch
                  %1541 = sbr.rel target = $region81
                $region86: #{feature_blending_forward.1} parent=78 // loop_exit
                  _
              $region79: #{feature_blending_forward.1} parent=63 // pred_fallthru
                _
              // Predicated region
              $region87: #{feature_blending_forward.1} parent=63 // pred_check
                _
              $region88: #{feature_blending_forward.1} parent=63 // pred_check_branch
                %1582 = sbr.rel target = $region90
              $region89: #{feature_blending_forward.1} parent=63 // pred_region
                _
              $region90: #{feature_blending_forward.1} parent=63 // pred_fallthru
                _
            $region64: #{feature_blending_forward.1} parent=59 // pred_fallthru
              _
            // Predicated region
            $region65: #{feature_blending_forward.1} parent=59 // pred_check
              _
            $region66: #{feature_blending_forward.1} parent=59 // pred_check_branch
              %1496 = sbr.rel target = $region68
            $region67: #{feature_blending_forward.1} parent=59 // pred_region
              %s1498 = ssub.s32 256, 1
              loop: start=0, step=1, limit=1
              $region69: #{feature_blending_forward.1} parent=67 // loop_pre_header
                _
              $region70: #{feature_blending_forward.1} parent=67 // loop_header
                %s1500 = sphi 0, %s1504
                %p1501 = scmp.ge.s32.totalorder %s1500, 1
                %s1505 = sphi %s1485, %s1485
                %s1506 = sphi %s1490, %s1490
              $region71: #{feature_blending_forward.1} parent=67 // loop_header_branch
                %1503 = sbr.rel (%p1501) target = $region75
              $region72: #{feature_blending_forward.1} parent=67 // loop_body
                %v1507 = vld [vmem:[%s1505] sm:%s1498]
                %1508 = vst [vmem:[%s1506] sm:%s1498] %v1507
                %v1509 = vld [vmem:[%s1505 + $0x8] sm:%s1498]
                %1510 = vst [vmem:[%s1506 + $0x10] sm:%s1498] %v1509
                %v1511 = vld [vmem:[%s1505 + $0x10] sm:%s1498]
                %1512 = vst [vmem:[%s1506 + $0x20] sm:%s1498] %v1511
                %v1513 = vld [vmem:[%s1505 + $0x18] sm:%s1498]
                %1514 = vst [vmem:[%s1506 + $0x30] sm:%s1498] %v1513
                %v1515 = vld [vmem:[%s1505 + $0x20] sm:%s1498]
                %1516 = vst [vmem:[%s1506 + $0x40] sm:%s1498] %v1515
                %v1517 = vld [vmem:[%s1505 + $0x28] sm:%s1498]
                %1518 = vst [vmem:[%s1506 + $0x50] sm:%s1498] %v1517
                %v1519 = vld [vmem:[%s1505 + $0x30] sm:%s1498]
                %1520 = vst [vmem:[%s1506 + $0x60] sm:%s1498] %v1519
                %v1521 = vld [vmem:[%s1505 + $0x38] sm:%s1498]
                %1522 = vst [vmem:[%s1506 + $0x70] sm:%s1498] %v1521
                %v1523 = vld [vmem:[%s1505 + $0x40] sm:%s1498]
                %1524 = vst [vmem:[%s1506 + $0x80] sm:%s1498] %v1523
                %v1525 = vld [vmem:[%s1505 + $0x48] sm:%s1498]
                %1526 = vst [vmem:[%s1506 + $0x90] sm:%s1498] %v1525
                %v1527 = vld [vmem:[%s1505 + $0x50] sm:%s1498]
                %1528 = vst [vmem:[%s1506 + $0xa0] sm:%s1498] %v1527
                %v1529 = vld [vmem:[%s1505 + $0x58] sm:%s1498]
                %1530 = vst [vmem:[%s1506 + $0xb0] sm:%s1498] %v1529
                %v1531 = vld [vmem:[%s1505 + $0x60] sm:%s1498]
                %1532 = vst [vmem:[%s1506 + $0xc0] sm:%s1498] %v1531
                %v1533 = vld [vmem:[%s1505 + $0x68] sm:%s1498]
                %1534 = vst [vmem:[%s1506 + $0xd0] sm:%s1498] %v1533
                %v1535 = vld [vmem:[%s1505 + $0x70] sm:%s1498]
                %1536 = vst [vmem:[%s1506 + $0xe0] sm:%s1498] %v1535
                %v1537 = vld [vmem:[%s1505 + $0x78] sm:%s1498]
                %1538 = vst [vmem:[%s1506 + $0xf0] sm:%s1498] %v1537
              $region73: #{feature_blending_forward.1} parent=67 // loop_footer
                %s1504 = sadd.s32 1, %s1500
              $region74: #{feature_blending_forward.1} parent=67 // loop_footer_branch
                %1499 = sbr.rel target = $region70
              $region75: #{feature_blending_forward.1} parent=67 // loop_exit
                _
            $region68: #{feature_blending_forward.1} parent=59 // pred_fallthru
              _
          $region60: #{feature_blending_forward.1} parent=55 // pred_fallthru
            _
          %1583 = vnop
        $region56: #{feature_blending_forward.1} parent=51 // pred_fallthru
          _
      $region52: #{feature_blending_forward.1} parent=5 // pred_fallthru
        _
      %p1584 = scmp.le.s32.totalorder 2, %s14
      // Predicated region
      $region91: #{feature_blending_forward.1} parent=5 // pred_check
        %p1585 = pneg %p1584
      $region92: #{feature_blending_forward.1} parent=5 // pred_check_branch
        %1587 = sbr.rel (%p1585) target = $region94
      $region93: #{feature_blending_forward.1} parent=5 // pred_region
        %s1588 = ssub.s32 %s14, 2
        // Predicated region
        $region95: #{feature_blending_forward.1} parent=93 // pred_check
          %p1589 = pneg %p216
        $region96: #{feature_blending_forward.1} parent=93 // pred_check_branch
          %1591 = sbr.rel (%p1589) target = $region98
        $region97: #{feature_blending_forward.1} parent=93 // pred_region
          %s1592 = sand.u32 %s201, 1
          %s1593 = sand.u32 %s201, 1
          %s1594 = smul.addr %s1593, 128
          %s1595 = scalar_lea.vmem [#allocation2], %s1594
        $region98: #{feature_blending_forward.1} parent=93 // pred_fallthru
          _
      $region94: #{feature_blending_forward.1} parent=5 // pred_fallthru
        _
    $region6: #{feature_blending_forward.1} parent=1 // loop_footer
      %s18 = sadd.s32 1, %s14
    $region7: #{feature_blending_forward.1} parent=1 // loop_footer_branch
      %13 = sbr.rel target = $region3
    $region8: #{feature_blending_forward.1} parent=1 // loop_exit
      _

</llo_original>
